<compile_context>
chip_gen: v6e
topology: v6e:2x2x1
jax: 0.10.0
libtpu: 0.0.40
codegen_flags: <defaults>
</compile_context>

<pallas_src>
import functools
import math

import jax
import jax.numpy as jnp
from jax import lax
from jax.experimental import pallas as pl
from jax.experimental.pallas import tpu as pltpu


def _flash_attention_kernel(q_ref, k_ref, v_ref, o_ref, m_sc, l_sc, acc_sc,
                            *, scale, mxu_bf16, f32_precision):
    kv = pl.program_id(2)

    @pl.when(kv == 0)
    def _():
        m_sc[...] = jnp.full_like(m_sc, -jnp.inf)
        l_sc[...] = jnp.zeros_like(l_sc)
        acc_sc[...] = jnp.zeros_like(acc_sc)

    # Fold the sqrt(Lq) scale into q: scales Lq*D elements instead of Lq*Lk.
    q = q_ref[...].astype(jnp.float32) * jnp.float32(scale)   # (bb, tq, D)
    k = k_ref[...]                                            # (bb, tk, D)
    v = v_ref[...]                                            # (bb, tk, Dv)

    if mxu_bf16:
        # bf16 MXU operands, f32 accumulation (softmax math stays f32).
        q = q.astype(jnp.bfloat16)
        k = k.astype(jnp.bfloat16)
        v = v.astype(jnp.bfloat16)
        mm_precision = None
    else:
        # True f32 matmuls on the MXU (multi-pass); needed because the
        # module's sqrt(Lq) scale makes logits large and exp() amplifies
        # bf16-pass error well past 1e-3 absolute output error.
        k = k.astype(jnp.float32)
        v = v.astype(jnp.float32)
        mm_precision = f32_precision

    # Q @ K^T without an explicit transpose: contract D on both operands,
    # batched over the batch-block axis, f32 accumulation on the MXU.
    s = lax.dot_general(
        q, k,
        dimension_numbers=(((2,), (2,)), ((0,), (0,))),
        preferred_element_type=jnp.float32,
        precision=mm_precision,
    )  # (bb, tq, tk) f32

    # Online (flash) softmax update, all elementwise math in f32.
    m_prev = m_sc[...]
    m_new = jnp.maximum(m_prev, jnp.max(s, axis=-1, keepdims=True))
    alpha = jnp.exp(m_prev - m_new)
    p = jnp.exp(s - m_new)                                    # unnormalized

    l_sc[...] = alpha * l_sc[...] + jnp.sum(p, axis=-1, keepdims=True)

    pv = lax.dot_general(
        p.astype(v.dtype), v,
        dimension_numbers=(((2,), (1,)), ((0,), (0,))),
        preferred_element_type=jnp.float32,
        precision=mm_precision,
    )  # (bb, tq, Dv) f32
    acc_sc[...] = alpha * acc_sc[...] + pv
    m_sc[...] = m_new

    @pl.when(kv == pl.num_programs(2) - 1)
    def _():
        if mxu_bf16:
            # Approx reciprocal on the otherwise-idle EUP slot is fine at
            # bf16 output accuracy.
            inv_l = pl.reciprocal(l_sc[...], approx=True)
            o_ref[...] = (acc_sc[...] * inv_l).astype(o_ref.dtype)
        else:
            # Exact normalize; only tq*Dv elements, negligible cost.
            o_ref[...] = (acc_sc[...] / l_sc[...]).astype(o_ref.dtype)


def _seq_tile(total, target, align=8):
    """Largest multiple of `align` that divides `total` and is <= target,
    else the full extent (always a legal TPU block shape)."""
    if total <= target:
        return total
    t = (target // align) * align
    while t >= align:
        if total % t == 0:
            return t
        t -= align
    return total


def _largest_divisor_leq(n, target):
    target = max(1, min(n, int(target)))
    for d in range(target, 0, -1):
        if n % d == 0:
            return d
    return 1


def attention(q, k, v, *, q_tile_target=256, kv_tile_target=512,
              mxu_bf16=None, f32_precision=lax.Precision.HIGHEST):
    """q: [B, Lq, D], k: [B, Lk, D], v: [B, Lk, Dv] -> [B, Lq, Dv]."""
    B, Lq, D = q.shape
    Bk, Lk, Dk = k.shape
    Bv, Lkv, Dv = v.shape
    assert B == Bk == Bv and D == Dk and Lk == Lkv

    if mxu_bf16 is None:
        mxu_bf16 = (q.dtype == jnp.bfloat16)

    # Flash-style tiling: q tiles (parallel) x streamed kv tiles (arbitrary).
    tq = _seq_tile(Lq, q_tile_target)
    tk = _seq_tile(Lk, kv_tile_target)

    # Fold several batch elements into one grid step when per-batch tiles are
    # tiny (denser stores, amortizes per-step pipeline overhead).
    itemsize = jnp.dtype(q.dtype).itemsize
    per_batch_bytes = ((tq * D + tk * D + tk * Dv + tq * Dv) * itemsize
                       + tq * (Dv + 2) * 4          # m/l/acc scratch
                       + tq * tk * 4)               # score tile
    bb = _largest_divisor_leq(B, (4 << 20) // max(per_batch_bytes, 1))

    grid = (B // bb, Lq // tq, Lk // tk)

    # Explicit scoped-VMEM budget from the chosen blocks (+headroom), clamped
    # so it stays inside v7x's 64 MiB physical VMEM.
    block_bytes = bb * (tq * D + tk * D + tk * Dv + tq * Dv) * itemsize
    scratch_bytes = bb * tq * (Dv + 2) * 4
    vmem_limit = int(min(max(3 * block_bytes + scratch_bytes + (8 << 20),
                             32 << 20), 48 << 20))

    kernel = functools.partial(
        _flash_attention_kernel,
        scale=math.sqrt(Lq),     # true (untiled) q.size(1), independent of tq
        mxu_bf16=mxu_bf16,
        f32_precision=f32_precision,
    )

    grid_spec = pltpu.PrefetchScalarGridSpec(
        num_scalar_prefetch=0,
        grid=grid,
        in_specs=[
            pl.BlockSpec((bb, tq, D), lambda b, qi, ki: (b, qi, 0)),
            pl.BlockSpec((bb, tk, D), lambda b, qi, ki: (b, ki, 0)),
            pl.BlockSpec((bb, tk, Dv), lambda b, qi, ki: (b, ki, 0)),
        ],
        out_specs=pl.BlockSpec((bb, tq, Dv), lambda b, qi, ki: (b, qi, 0)),
        scratch_shapes=[
            pltpu.VMEM((bb, tq, 1), jnp.float32),    # running max
            pltpu.VMEM((bb, tq, 1), jnp.float32),    # running denom
            pltpu.VMEM((bb, tq, Dv), jnp.float32),   # output accumulator
        ],
    )

    return pl.pallas_call(
        kernel,
        out_shape=jax.ShapeDtypeStruct((B, Lq, Dv), q.dtype),
        grid_spec=grid_spec,
        compiler_params=pltpu.CompilerParams(
            dimension_semantics=("parallel", "parallel", "arbitrary"),
            vmem_limit_bytes=vmem_limit,
        ),
    )(q, k, v)


def _attention_ref(q, k, v):
    scale = math.sqrt(q.shape[1])
    s = jnp.einsum("bqd,bkd->bqk", q.astype(jnp.float32), k.astype(jnp.float32),
                   precision=lax.Precision.HIGHEST) * scale
    p = jax.nn.softmax(s, axis=-1)
    return jnp.einsum("bqk,bkd->bqd", p, v.astype(jnp.float32),
                      precision=lax.Precision.HIGHEST)


if __name__ == "__main__":
    key = jax.random.PRNGKey(0)
    kq, kk, kv_ = jax.random.split(key, 3)

    # Small shapes consistent with the module's bmm convention.
    B, Lq, Lk, D, Dv = 2, 8, 8, 32, 32
    q = jax.random.normal(kq, (B, Lq, D), dtype=jnp.float32)
    k = jax.random.normal(kk, (B, Lk, D), dtype=jnp.float32)
    v = jax.random.normal(kv_, (B, Lk, Dv), dtype=jnp.float32)

    out = attention(q, k, v)
    jax.block_until_ready(out)
    ref = _attention_ref(q, k, v)
    assert out.shape == (B, Lq, Dv)
    assert bool(jnp.all(jnp.isfinite(out)))
    assert jnp.allclose(out, ref, atol=2e-3, rtol=2e-3), \
        float(jnp.max(jnp.abs(out - ref)))

    # Exercise the multi-tile flash path: several q/kv tiles, lane-dense
    # D/Dv = 128, batch-block > 1.  (This is the case that previously failed
    # at DEFAULT MXU precision; HIGHEST-precision f32 matmuls fix it.)
    B2, Lq2, Lk2, D2, Dv2 = 2, 512, 1024, 128, 128
    k2q, k2k, k2v = jax.random.split(jax.random.PRNGKey(1), 3)
    q2 = jax.random.normal(k2q, (B2, Lq2, D2), dtype=jnp.float32)
    k2 = jax.random.normal(k2k, (B2, Lk2, D2), dtype=jnp.float32)
    v2 = jax.random.normal(k2v, (B2, Lk2, Dv2), dtype=jnp.float32)
    out2 = attention(q2, k2, v2)
    jax.block_until_ready(out2)
    ref2 = _attention_ref(q2, k2, v2)
    assert jnp.allclose(out2, ref2, atol=2e-3, rtol=2e-3), \
        float(jnp.max(jnp.abs(out2 - ref2)))

    # bf16 MXU operands with f32 accumulation (looser tolerance vs f32 ref).
    out_bf16 = attention(q, k, v, mxu_bf16=True)
    jax.block_until_ready(out_bf16)
    assert out_bf16.shape == (B, Lq, Dv)
    assert bool(jnp.all(jnp.isfinite(out_bf16)))
    assert jnp.allclose(out_bf16.astype(jnp.float32), ref, atol=2e-1, rtol=2e-1)

    print("KERNEL_OK")
</pallas_src>

<mosaic_0001>
module attributes {stable_mosaic.version = 11 : i64} {
  func.func @_flash_attention_kernel(%arg0: i32, %arg1: i32, %arg2: i32, %arg3: memref<2x8x32xf32, #tpu.memory_space<vmem>>, %arg4: memref<2x8x32xf32, #tpu.memory_space<vmem>>, %arg5: memref<2x8x32xf32, #tpu.memory_space<vmem>>, %arg6: memref<2x8x32xf32, #tpu.memory_space<vmem>>, %arg7: memref<2x8x1xf32, #tpu.memory_space<vmem>>, %arg8: memref<2x8x1xf32, #tpu.memory_space<vmem>>, %arg9: memref<2x8x32xf32, #tpu.memory_space<vmem>>) attributes {dimension_semantics = [#tpu.dimension_semantics<parallel>, #tpu.dimension_semantics<parallel>, #tpu.dimension_semantics<arbitrary>], iteration_bounds = array<i64: 1, 1, 1>, scalar_prefetch = 0 : i64, scratch_operands = 3 : i64, tpu.core_type = #tpu.core_type<tc>, window_params = [{transform_indices = @transform_0, window_bounds = array<i64: 2, 8, 32>}, {transform_indices = @transform_1, window_bounds = array<i64: 2, 8, 32>}, {transform_indices = @transform_2, window_bounds = array<i64: 2, 8, 32>}, {transform_indices = @transform_3, window_bounds = array<i64: 2, 8, 32>}]} {
    %c0_i32 = arith.constant 0 : i32
    %0 = arith.cmpi eq, %arg2, %c0_i32 : i32
    %1 = arith.extui %0 : i1 to i32
    %c0_i32_0 = arith.constant 0 : i32
    %2 = arith.cmpi ne, %1, %c0_i32_0 : i32
    scf.if %2 {
      %cst_33 = arith.constant 0xFF800000 : f32
      %34 = vector.broadcast %cst_33 : f32 to vector<2x8x1xf32>
      %c0_34 = arith.constant 0 : index
      %c0_35 = arith.constant 0 : index
      %c0_36 = arith.constant 0 : index
      %35 = vector.load %arg7[%c0_34, %c0_35, %c0_36] : memref<2x8x1xf32, #tpu.memory_space<vmem>>, vector<2x8x1xf32>
      tpu.vector_store %arg7[%c0_34, %c0_35, %c0_36], %34 {strides = array<i32>} : memref<2x8x1xf32, #tpu.memory_space<vmem>>, vector<2x8x1xf32>,
      %cst_37 = arith.constant 0.000000e+00 : f32
      %36 = vector.broadcast %cst_37 : f32 to vector<2x8x1xf32>
      %c0_38 = arith.constant 0 : index
      %c0_39 = arith.constant 0 : index
      %c0_40 = arith.constant 0 : index
      %37 = vector.load %arg8[%c0_38, %c0_39, %c0_40] : memref<2x8x1xf32, #tpu.memory_space<vmem>>, vector<2x8x1xf32>
      tpu.vector_store %arg8[%c0_38, %c0_39, %c0_40], %36 {strides = array<i32>} : memref<2x8x1xf32, #tpu.memory_space<vmem>>, vector<2x8x1xf32>,
      %cst_41 = arith.constant 0.000000e+00 : f32
      %38 = vector.broadcast %cst_41 : f32 to vector<2x8x32xf32>
      %c0_42 = arith.constant 0 : index
      %c0_43 = arith.constant 0 : index
      %c0_44 = arith.constant 0 : index
      %39 = vector.load %arg9[%c0_42, %c0_43, %c0_44] : memref<2x8x32xf32, #tpu.memory_space<vmem>>, vector<2x8x32xf32>
      tpu.vector_store %arg9[%c0_42, %c0_43, %c0_44], %38 {strides = array<i32>} : memref<2x8x32xf32, #tpu.memory_space<vmem>>, vector<2x8x32xf32>,
    } else {
    }
    %c0 = arith.constant 0 : index
    %c0_1 = arith.constant 0 : index
    %c0_2 = arith.constant 0 : index
    %3 = vector.load %arg3[%c0, %c0_1, %c0_2] : memref<2x8x32xf32, #tpu.memory_space<vmem>>, vector<2x8x32xf32>
    %cst = arith.constant 2.82842708 : f32
    %4 = vector.broadcast %cst : f32 to vector<2x8x32xf32>
    %5 = arith.mulf %3, %4 : vector<2x8x32xf32>
    %c0_3 = arith.constant 0 : index
    %c0_4 = arith.constant 0 : index
    %c0_5 = arith.constant 0 : index
    %6 = vector.load %arg4[%c0_3, %c0_4, %c0_5] : memref<2x8x32xf32, #tpu.memory_space<vmem>>, vector<2x8x32xf32>
    %c0_6 = arith.constant 0 : index
    %c0_7 = arith.constant 0 : index
    %c0_8 = arith.constant 0 : index
    %7 = vector.load %arg5[%c0_6, %c0_7, %c0_8] : memref<2x8x32xf32, #tpu.memory_space<vmem>>, vector<2x8x32xf32>
    %cst_9 = arith.constant dense<0.000000e+00> : vector<2x8x8xf32>
    %8 = tpu.matmul %5, %6, %cst_9 {dimension_numbers = #tpu.dot_dimension_numbers<[2], [2], [1], [1], [0, 0, 0, 1, 1, 1], [0], [0]>, precision = #tpu.contract_precision<fp32>} : vector<2x8x32xf32>, vector<2x8x32xf32>, vector<2x8x8xf32> -> vector<2x8x8xf32>
    %c0_10 = arith.constant 0 : index
    %c0_11 = arith.constant 0 : index
    %c0_12 = arith.constant 0 : index
    %9 = vector.load %arg7[%c0_10, %c0_11, %c0_12] : memref<2x8x1xf32, #tpu.memory_space<vmem>>, vector<2x8x1xf32>
    %cst_13 = arith.constant dense<0xFF800000> : vector<2x8xf32>
    %10 = vector.multi_reduction <maximumf>, %8, %cst_13 [2] : vector<2x8x8xf32> to vector<2x8xf32>
    %11 = vector.shape_cast %10 : vector<2x8xf32> to vector<2x8x1xf32>
    %12 = arith.maximumf %9, %11 : vector<2x8x1xf32>
    %13 = arith.subf %9, %12 : vector<2x8x1xf32>
    %14 = math.exp %13 : vector<2x8x1xf32>
    %15 = vector.broadcast %12 : vector<2x8x1xf32> to vector<2x8x8xf32>
    %16 = arith.subf %8, %15 : vector<2x8x8xf32>
    %17 = math.exp %16 : vector<2x8x8xf32>
    %c0_14 = arith.constant 0 : index
    %c0_15 = arith.constant 0 : index
    %c0_16 = arith.constant 0 : index
    %18 = vector.load %arg8[%c0_14, %c0_15, %c0_16] : memref<2x8x1xf32, #tpu.memory_space<vmem>>, vector<2x8x1xf32>
    %19 = arith.mulf %14, %18 : vector<2x8x1xf32>
    %cst_17 = arith.constant dense<0.000000e+00> : vector<2x8xf32>
    %20 = vector.multi_reduction <add>, %17, %cst_17 [2] : vector<2x8x8xf32> to vector<2x8xf32>
    %21 = vector.shape_cast %20 : vector<2x8xf32> to vector<2x8x1xf32>
    %22 = arith.addf %19, %21 : vector<2x8x1xf32>
    %c0_18 = arith.constant 0 : index
    %c0_19 = arith.constant 0 : index
    %c0_20 = arith.constant 0 : index
    %23 = vector.load %arg8[%c0_18, %c0_19, %c0_20] : memref<2x8x1xf32, #tpu.memory_space<vmem>>, vector<2x8x1xf32>
    tpu.vector_store %arg8[%c0_18, %c0_19, %c0_20], %22 {strides = array<i32>} : memref<2x8x1xf32, #tpu.memory_space<vmem>>, vector<2x8x1xf32>,
    %cst_21 = arith.constant dense<0.000000e+00> : vector<2x8x32xf32>
    %24 = tpu.matmul %17, %7, %cst_21 {dimension_numbers = #tpu.dot_dimension_numbers<[2], [1], [1], [2], [0, 0, 0, 1, 1, 2], [0], [0]>, precision = #tpu.contract_precision<fp32>} : vector<2x8x8xf32>, vector<2x8x32xf32>, vector<2x8x32xf32> -> vector<2x8x32xf32>
    %c0_22 = arith.constant 0 : index
    %c0_23 = arith.constant 0 : index
    %c0_24 = arith.constant 0 : index
    %25 = vector.load %arg9[%c0_22, %c0_23, %c0_24] : memref<2x8x32xf32, #tpu.memory_space<vmem>>, vector<2x8x32xf32>
    %26 = vector.broadcast %14 : vector<2x8x1xf32> to vector<2x8x32xf32>
    %27 = arith.mulf %26, %25 : vector<2x8x32xf32>
    %28 = arith.addf %27, %24 : vector<2x8x32xf32>
    %c0_25 = arith.constant 0 : index
    %c0_26 = arith.constant 0 : index
    %c0_27 = arith.constant 0 : index
    %29 = vector.load %arg9[%c0_25, %c0_26, %c0_27] : memref<2x8x32xf32, #tpu.memory_space<vmem>>, vector<2x8x32xf32>
    tpu.vector_store %arg9[%c0_25, %c0_26, %c0_27], %28 {strides = array<i32>} : memref<2x8x32xf32, #tpu.memory_space<vmem>>, vector<2x8x32xf32>,
    %c0_28 = arith.constant 0 : index
    %c0_29 = arith.constant 0 : index
    %c0_30 = arith.constant 0 : index
    %30 = vector.load %arg7[%c0_28, %c0_29, %c0_30] : memref<2x8x1xf32, #tpu.memory_space<vmem>>, vector<2x8x1xf32>
    tpu.vector_store %arg7[%c0_28, %c0_29, %c0_30], %12 {strides = array<i32>} : memref<2x8x1xf32, #tpu.memory_space<vmem>>, vector<2x8x1xf32>,
    %c0_i32_31 = arith.constant 0 : i32
    %31 = arith.cmpi eq, %arg2, %c0_i32_31 : i32
    %32 = arith.extui %31 : i1 to i32
    %c0_i32_32 = arith.constant 0 : i32
    %33 = arith.cmpi ne, %32, %c0_i32_32 : i32
    scf.if %33 {
      %c0_33 = arith.constant 0 : index
      %c0_34 = arith.constant 0 : index
      %c0_35 = arith.constant 0 : index
      %34 = vector.load %arg9[%c0_33, %c0_34, %c0_35] : memref<2x8x32xf32, #tpu.memory_space<vmem>>, vector<2x8x32xf32>
      %c0_36 = arith.constant 0 : index
      %c0_37 = arith.constant 0 : index
      %c0_38 = arith.constant 0 : index
      %35 = vector.load %arg8[%c0_36, %c0_37, %c0_38] : memref<2x8x1xf32, #tpu.memory_space<vmem>>, vector<2x8x1xf32>
      %36 = vector.broadcast %35 : vector<2x8x1xf32> to vector<2x8x32xf32>
      %37 = arith.divf %34, %36 : vector<2x8x32xf32>
      %c0_39 = arith.constant 0 : index
      %c0_40 = arith.constant 0 : index
      %c0_41 = arith.constant 0 : index
      %38 = vector.load %arg6[%c0_39, %c0_40, %c0_41] : memref<2x8x32xf32, #tpu.memory_space<vmem>>, vector<2x8x32xf32>
      tpu.vector_store %arg6[%c0_39, %c0_40, %c0_41], %37 {strides = array<i32>} : memref<2x8x32xf32, #tpu.memory_space<vmem>>, vector<2x8x32xf32>,
    } else {
    }
    return
  }
  func.func @transform_0(%arg0: i32, %arg1: i32, %arg2: i32) -> (i32, i32, i32) {
    %c0_i32 = arith.constant 0 : i32
    %c0_i32_0 = arith.constant 0 : i32
    return %arg0, %arg1, %c0_i32 : i32, i32, i32
  }
  func.func @transform_1(%arg0: i32, %arg1: i32, %arg2: i32) -> (i32, i32, i32) {
    %c0_i32 = arith.constant 0 : i32
    %c0_i32_0 = arith.constant 0 : i32
    return %arg0, %arg2, %c0_i32 : i32, i32, i32
  }
  func.func @transform_2(%arg0: i32, %arg1: i32, %arg2: i32) -> (i32, i32, i32) {
    %c0_i32 = arith.constant 0 : i32
    %c0_i32_0 = arith.constant 0 : i32
    return %arg0, %arg2, %c0_i32 : i32, i32, i32
  }
  func.func @transform_3(%arg0: i32, %arg1: i32, %arg2: i32) -> (i32, i32, i32) {
    %c0_i32 = arith.constant 0 : i32
    %c0_i32_0 = arith.constant 0 : i32
    return %arg0, %arg1, %c0_i32 : i32, i32, i32
  }
}

</mosaic_0001>

<llo_original>
// kernel: tpu_custom_call.1
$region0: #{tpu_custom_call.1}
  #allocation0 [shape = 'u32[]', space=smem, size = 0x4, offset = 0x4, fixed_abs, tag = 'smem constant byte address 0x4 - core index']
  #allocation1 [shape = 'u32[144,128]{1,0:T(1,128)}', space=vmem, size = 0x12000, scoped, tag = 'internal scratch']
  #allocation2 [shape = 'f32[2,8,1]{2,1,0:T(8,128)}', space=vmem, size = 0x2000, scoped, tag = 'scratch operand']
  #allocation3 [shape = 'f32[2,8,1]{2,1,0:T(8,128)}', space=vmem, size = 0x2000, scoped, tag = 'scratch operand']
  #allocation4 [shape = 'f32[2,8,32]{2,1,0:T(8,128)}', space=vmem, size = 0x2000, scoped, tag = 'scratch operand']
  %s0 = inlined_call_operand.hbm [shape: f32[2,8,32], index: 0, kind: input, shape index: {}]
  %s1 = inlined_call_operand.hbm [shape: f32[2,8,32], index: 1, kind: input, shape index: {}]
  %s2 = inlined_call_operand.hbm [shape: f32[2,8,32], index: 2, kind: input, shape index: {}]
  %s3 = inlined_call_operand.hbm [shape: f32[2,8,32], index: 3, kind: output, shape index: {}]
  %s4 = sld [smem:[#allocation0]]
  $region42: #{tpu_custom_call.1} parent=0
    _
  %s6 = ssub.s32 1, %s4
  %s7 = scalar_select 0, %s6, %s4
  $region1: #{tpu_custom_call.1} parent=0
    #allocation5 [shape = 'u8[8192]{0}', space=vmem, size = 0x2000, scoped, tag = 'input window, operand 0, single buffered']
    #allocation6 [shape = 's32[1]{0}', space=sflag, size = 0x4, scoped, tag = 'scoped memory for tpu_custom_call.1']
    #allocation7 [shape = 's32[1]{0}', space=sflag, size = 0x4, scoped, tag = 'scoped memory for tpu_custom_call.1']
    #allocation8 [shape = 'u8[8192]{0}', space=vmem, size = 0x2000, scoped, tag = 'input window, operand 1, single buffered']
    #allocation9 [shape = 's32[1]{0}', space=sflag, size = 0x4, scoped, tag = 'scoped memory for tpu_custom_call.1']
    #allocation10 [shape = 'u8[8192]{0}', space=vmem, size = 0x2000, scoped, tag = 'input window, operand 2, single buffered']
    #allocation11 [shape = 'u8[8192]{0}', space=vmem, size = 0x2000, scoped, tag = 'output window, operand 0, single buffered']
    %8 = vsyncpa [#allocation6], 0
    %9 = vsyncpa [#allocation9], 0
    %10 = vsyncpa [#allocation7], 0
    // Predicated region
    $region2: #{tpu_custom_call.1} parent=1 // pred_check
      _
    $region3: #{tpu_custom_call.1} parent=1 // pred_check_branch
      %12 = sbr.rel (0) target = $region5
    $region4: #{tpu_custom_call.1} parent=1 // pred_region
      %s14 = ssub.s32 256, 256
      %15 = vsyncadd [#allocation6], %s14
      %s16 = sshll.u32 [#allocation5], 4
      %s17 = int_to_ptr.vmem [resolvable:$true] %s16
      %22 = dma.hbm_to_vmem [thread:$0]  %s0, 256, %s17, [#allocation6], 128, 128, 8
    $region5: #{tpu_custom_call.1} parent=1 // pred_fallthru
      _
    // Predicated region
    $region6: #{tpu_custom_call.1} parent=1 // pred_check
      _
    $region7: #{tpu_custom_call.1} parent=1 // pred_check_branch
      %24 = sbr.rel (0) target = $region9
    $region8: #{tpu_custom_call.1} parent=1 // pred_region
      %s26 = ssub.s32 256, 256
      %27 = vsyncadd [#allocation9], %s26
      %s28 = sshll.u32 [#allocation8], 4
      %s29 = int_to_ptr.vmem [resolvable:$true] %s28
      %34 = dma.hbm_to_vmem [thread:$0]  %s1, 256, %s29, [#allocation9], 128, 128, 8
    $region9: #{tpu_custom_call.1} parent=1 // pred_fallthru
      _
    // Predicated region
    $region10: #{tpu_custom_call.1} parent=1 // pred_check
      _
    $region11: #{tpu_custom_call.1} parent=1 // pred_check_branch
      %36 = sbr.rel (0) target = $region13
    $region12: #{tpu_custom_call.1} parent=1 // pred_region
      %s38 = ssub.s32 256, 256
      %39 = vsyncadd [#allocation9], %s38
      %s40 = sshll.u32 [#allocation10], 4
      %s41 = int_to_ptr.vmem [resolvable:$true] %s40
      %46 = dma.hbm_to_vmem [thread:$0]  %s2, 256, %s41, [#allocation9], 128, 128, 8
    $region13: #{tpu_custom_call.1} parent=1 // pred_fallthru
      _
    // Predicated region
    $region14: #{tpu_custom_call.1} parent=1 // pred_check
      _
    $region15: #{tpu_custom_call.1} parent=1 // pred_check_branch
      %48 = sbr.rel (0) target = $region17
    $region16: #{tpu_custom_call.1} parent=1 // pred_region
      %49 = dma.done [#allocation6], 256
    $region17: #{tpu_custom_call.1} parent=1 // pred_fallthru
      _
    // Predicated region
    $region18: #{tpu_custom_call.1} parent=1 // pred_check
      _
    $region19: #{tpu_custom_call.1} parent=1 // pred_check_branch
      %51 = sbr.rel (0) target = $region21
    $region20: #{tpu_custom_call.1} parent=1 // pred_region
      %52 = dma.done [#allocation9], 256
    $region21: #{tpu_custom_call.1} parent=1 // pred_fallthru
      _
    // Predicated region
    $region22: #{tpu_custom_call.1} parent=1 // pred_check
      _
    $region23: #{tpu_custom_call.1} parent=1 // pred_check_branch
      %54 = sbr.rel (0) target = $region25
    $region24: #{tpu_custom_call.1} parent=1 // pred_region
      %55 = dma.done [#allocation9], 256
    $region25: #{tpu_custom_call.1} parent=1 // pred_fallthru
      _
    %p56 = scmp.eq.s32.totalorder 0, 0
    // Predicated region
    $region26: #{tpu_custom_call.1} parent=1 // pred_check
      %p57 = pneg %p56
    $region27: #{tpu_custom_call.1} parent=1 // pred_check_branch
      %59 = sbr.rel (%p57) target = $region29
    $region28: #{tpu_custom_call.1} parent=1 // pred_region
      %vm60 = vcmask 7168
      %61 = vst.msk [vmem:[#allocation2] sm:$0xff] %vm60, -inf
      %62 = vst.msk [vmem:[#allocation2 + $0x8] sm:$0xff] %vm60, -inf
      %63 = vst.msk [vmem:[#allocation3] sm:$0xff] %vm60, 0.0
      %64 = vst.msk [vmem:[#allocation3 + $0x8] sm:$0xff] %vm60, 0.0
      %vm65 = vcmask 261120
      %66 = vst.msk [vmem:[#allocation4] sm:$0xff] %vm65, 0.0
      %67 = vst.msk [vmem:[#allocation4 + $0x8] sm:$0xff] %vm65, 0.0
    $region29: #{tpu_custom_call.1} parent=1 // pred_fallthru
      _
    %v68 = vld [vmem:[#allocation5] sm:$0xff]
    %v69 = vld [vmem:[#allocation5 + $0x8] sm:$0xff]
    %v70 = vmul.f32 %v68, 2.828427
    %v71 = vmul.f32 %v69, 2.828427
    %v72 = vld [vmem:[#allocation8] sm:$0xff]
    %v73 = vld [vmem:[#allocation8 + $0x8] sm:$0xff]
    %v74 = vld [vmem:[#allocation10] sm:$0xff]
    %v75 = vld [vmem:[#allocation10 + $0x8] sm:$0xff]
    %vm76 = vcmask 261120
    %v78 = vsel %vm76, %v70, 0
    %v81 = vsel %vm76, %v72, 0
    %83 = vmatprep.subr.mxu0 0.0
    %84 = vmatpush1.xpose.msra.mxu0 0.0
    %85 = vmatprep.subr.mxu0 0.0
    %86 = vmatpush1.xpose.msra.mxu0 0.0
    %87 = vmatprep.subr.mxu0 0.0
    %88 = vmatpush1.xpose.msra.mxu0 0.0
    %89 = vmatprep.subr.mxu0 0.0
    %90 = vmatpush1.xpose.msra.mxu0 0.0
    %91 = vmatprep.subr.mxu0 0.0
    %92 = vmatpush1.xpose.msra.mxu0 0.0
    %93 = vmatprep.subr.mxu0 0.0
    %94 = vmatpush1.xpose.msra.mxu0 0.0
    %95 = vmatprep.subr.mxu0 0.0
    %96 = vmatpush1.xpose.msra.mxu0 0.0
    %97 = vmatprep.subr.mxu0 0.0
    %98 = vmatpush1.xpose.msra.mxu0 0.0
    %99 = vmatprep.subr.mxu0 0.0
    %100 = vmatpush1.xpose.msra.mxu0 0.0
    %101 = vmatprep.subr.mxu0 0.0
    %102 = vmatpush1.xpose.msra.mxu0 0.0
    %103 = vmatprep.subr.mxu0 0.0
    %104 = vmatpush1.xpose.msra.mxu0 0.0
    %105 = vmatprep.subr.mxu0 0.0
    %106 = vmatpush1.xpose.msra.mxu0 0.0
    %107 = vmatprep.subr.mxu0 0.0
    %108 = vmatpush1.xpose.msra.mxu0 0.0
    %109 = vmatprep.subr.mxu0 0.0
    %110 = vmatpush1.xpose.msra.mxu0 0.0
    %111 = vmatprep.subr.mxu0 0.0
    %112 = vmatpush1.xpose.msra.mxu0 0.0
    %113 = vmatprep.subr.mxu0 0.0
    %v114 = vand.u32 %v81, 4294901760
    %115 = vmatpush1.xpose.msra.mxu0 %v114
    %116 = vmatprep.subr.mxu0 0.0
    %117 = vmatpush2.xpose.msra.mxu0 0.0
    %118 = vmatprep.subr.mxu0 0.0
    %119 = vmatpush2.xpose.msra.mxu0 0.0
    %120 = vmatprep.subr.mxu0 0.0
    %121 = vmatpush2.xpose.msra.mxu0 0.0
    %122 = vmatprep.subr.mxu0 0.0
    %123 = vmatpush2.xpose.msra.mxu0 0.0
    %124 = vmatprep.subr.mxu0 0.0
    %125 = vmatpush2.xpose.msra.mxu0 0.0
    %126 = vmatprep.subr.mxu0 0.0
    %127 = vmatpush2.xpose.msra.mxu0 0.0
    %128 = vmatprep.subr.mxu0 0.0
    %129 = vmatpush2.xpose.msra.mxu0 0.0
    %130 = vmatprep.subr.mxu0 0.0
    %131 = vmatpush2.xpose.msra.mxu0 0.0
    %132 = vmatprep.subr.mxu0 0.0
    %133 = vmatpush2.xpose.msra.mxu0 0.0
    %134 = vmatprep.subr.mxu0 0.0
    %135 = vmatpush2.xpose.msra.mxu0 0.0
    %136 = vmatprep.subr.mxu0 0.0
    %137 = vmatpush2.xpose.msra.mxu0 0.0
    %138 = vmatprep.subr.mxu0 0.0
    %139 = vmatpush2.xpose.msra.mxu0 0.0
    %140 = vmatprep.subr.mxu0 0.0
    %141 = vmatpush2.xpose.msra.mxu0 0.0
    %142 = vmatprep.subr.mxu0 0.0
    %143 = vmatpush2.xpose.msra.mxu0 0.0
    %144 = vmatprep.subr.mxu0 0.0
    %145 = vmatpush2.xpose.msra.mxu0 0.0
    %146 = vmatprep.subr.mxu0 0.0
    %147 = vmatpush2.xpose.msra.mxu0 0.0
    %148 = vmatprep.mubr.f32.mxu0 0.0
    %v149 = vand.u32 %v78, 4294901760
    %v150 = vsub.f32 %v78, %v149
    %v151 = vand.u32 %v150, 4294901760
    %v152 = vsub.f32 %v150, %v151
    %v153 = vand.u32 %v152, 4294901760
    %154 = vmatmul.mubr.f32.gmra.mxu0 %v153
    %v155 = vpop.f32.mrf.mxu0
    %v156 = vadd.f32 0.0, %v155
    %v157 = vpop.f32.mrf.mxu0
    %158 = vdwg.mxu0
    %159 = vmatprep.subr.mxu0 0.0
    %160 = vmatpush1.xpose.msra.mxu0 0.0
    %161 = vmatprep.subr.mxu0 0.0
    %162 = vmatpush1.xpose.msra.mxu0 0.0
    %163 = vmatprep.subr.mxu0 0.0
    %164 = vmatpush1.xpose.msra.mxu0 0.0
    %165 = vmatprep.subr.mxu0 0.0
    %166 = vmatpush1.xpose.msra.mxu0 0.0
    %167 = vmatprep.subr.mxu0 0.0
    %168 = vmatpush1.xpose.msra.mxu0 0.0
    %169 = vmatprep.subr.mxu0 0.0
    %170 = vmatpush1.xpose.msra.mxu0 0.0
    %171 = vmatprep.subr.mxu0 0.0
    %172 = vmatpush1.xpose.msra.mxu0 0.0
    %173 = vmatprep.subr.mxu0 0.0
    %174 = vmatpush1.xpose.msra.mxu0 0.0
    %175 = vmatprep.subr.mxu0 0.0
    %176 = vmatpush1.xpose.msra.mxu0 0.0
    %177 = vmatprep.subr.mxu0 0.0
    %178 = vmatpush1.xpose.msra.mxu0 0.0
    %179 = vmatprep.subr.mxu0 0.0
    %180 = vmatpush1.xpose.msra.mxu0 0.0
    %181 = vmatprep.subr.mxu0 0.0
    %182 = vmatpush1.xpose.msra.mxu0 0.0
    %183 = vmatprep.subr.mxu0 0.0
    %184 = vmatpush1.xpose.msra.mxu0 0.0
    %185 = vmatprep.subr.mxu0 0.0
    %186 = vmatpush1.xpose.msra.mxu0 0.0
    %187 = vmatprep.subr.mxu0 0.0
    %188 = vmatpush1.xpose.msra.mxu0 0.0
    %189 = vmatprep.subr.mxu0 0.0
    %v190 = vand.u32 %v81, 4294901760
    %v191 = vsub.f32 %v81, %v190
    %v192 = vand.u32 %v191, 4294901760
    %v193 = vsub.f32 %v191, %v192
    %v194 = vand.u32 %v193, 4294901760
    %195 = vmatpush1.xpose.msra.mxu0 %v194
    %196 = vmatprep.subr.mxu0 0.0
    %197 = vmatpush2.xpose.msra.mxu0 0.0
    %198 = vmatprep.subr.mxu0 0.0
    %199 = vmatpush2.xpose.msra.mxu0 0.0
    %200 = vmatprep.subr.mxu0 0.0
    %201 = vmatpush2.xpose.msra.mxu0 0.0
    %202 = vmatprep.subr.mxu0 0.0
    %203 = vmatpush2.xpose.msra.mxu0 0.0
    %204 = vmatprep.subr.mxu0 0.0
    %205 = vmatpush2.xpose.msra.mxu0 0.0
    %206 = vmatprep.subr.mxu0 0.0
    %207 = vmatpush2.xpose.msra.mxu0 0.0
    %208 = vmatprep.subr.mxu0 0.0
    %209 = vmatpush2.xpose.msra.mxu0 0.0
    %210 = vmatprep.subr.mxu0 0.0
    %211 = vmatpush2.xpose.msra.mxu0 0.0
    %212 = vmatprep.subr.mxu0 0.0
    %213 = vmatpush2.xpose.msra.mxu0 0.0
    %214 = vmatprep.subr.mxu0 0.0
    %215 = vmatpush2.xpose.msra.mxu0 0.0
    %216 = vmatprep.subr.mxu0 0.0
    %217 = vmatpush2.xpose.msra.mxu0 0.0
    %218 = vmatprep.subr.mxu0 0.0
    %219 = vmatpush2.xpose.msra.mxu0 0.0
    %220 = vmatprep.subr.mxu0 0.0
    %221 = vmatpush2.xpose.msra.mxu0 0.0
    %222 = vmatprep.subr.mxu0 0.0
    %223 = vmatpush2.xpose.msra.mxu0 0.0
    %224 = vmatprep.subr.mxu0 0.0
    %225 = vmatpush2.xpose.msra.mxu0 0.0
    %226 = vmatprep.subr.mxu0 0.0
    %227 = vmatpush2.xpose.msra.mxu0 0.0
    %228 = vmatprep.mubr.f32.mxu0 0.0
    %v229 = vand.u32 %v78, 4294901760
    %230 = vmatmul.mubr.f32.gmra.mxu0 %v229
    %v231 = vpop.f32.mrf.mxu0
    %v232 = vadd.f32 %v156, %v231
    %v233 = vpop.f32.mrf.mxu0
    %234 = vdwg.mxu0
    %235 = vmatprep.subr.mxu0 0.0
    %236 = vmatpush1.xpose.msra.mxu0 0.0
    %237 = vmatprep.subr.mxu0 0.0
    %238 = vmatpush1.xpose.msra.mxu0 0.0
    %239 = vmatprep.subr.mxu0 0.0
    %240 = vmatpush1.xpose.msra.mxu0 0.0
    %241 = vmatprep.subr.mxu0 0.0
    %242 = vmatpush1.xpose.msra.mxu0 0.0
    %243 = vmatprep.subr.mxu0 0.0
    %244 = vmatpush1.xpose.msra.mxu0 0.0
    %245 = vmatprep.subr.mxu0 0.0
    %246 = vmatpush1.xpose.msra.mxu0 0.0
    %247 = vmatprep.subr.mxu0 0.0
    %248 = vmatpush1.xpose.msra.mxu0 0.0
    %249 = vmatprep.subr.mxu0 0.0
    %250 = vmatpush1.xpose.msra.mxu0 0.0
    %251 = vmatprep.subr.mxu0 0.0
    %252 = vmatpush1.xpose.msra.mxu0 0.0
    %253 = vmatprep.subr.mxu0 0.0
    %254 = vmatpush1.xpose.msra.mxu0 0.0
    %255 = vmatprep.subr.mxu0 0.0
    %256 = vmatpush1.xpose.msra.mxu0 0.0
    %257 = vmatprep.subr.mxu0 0.0
    %258 = vmatpush1.xpose.msra.mxu0 0.0
    %259 = vmatprep.subr.mxu0 0.0
    %260 = vmatpush1.xpose.msra.mxu0 0.0
    %261 = vmatprep.subr.mxu0 0.0
    %262 = vmatpush1.xpose.msra.mxu0 0.0
    %263 = vmatprep.subr.mxu0 0.0
    %264 = vmatpush1.xpose.msra.mxu0 0.0
    %265 = vmatprep.subr.mxu0 0.0
    %v266 = vand.u32 %v81, 4294901760
    %v267 = vsub.f32 %v81, %v266
    %268 = vmatpush1.xpose.msra.mxu0 %v267
    %269 = vmatprep.subr.mxu0 0.0
    %270 = vmatpush2.xpose.msra.mxu0 0.0
    %271 = vmatprep.subr.mxu0 0.0
    %272 = vmatpush2.xpose.msra.mxu0 0.0
    %273 = vmatprep.subr.mxu0 0.0
    %274 = vmatpush2.xpose.msra.mxu0 0.0
    %275 = vmatprep.subr.mxu0 0.0
    %276 = vmatpush2.xpose.msra.mxu0 0.0
    %277 = vmatprep.subr.mxu0 0.0
    %278 = vmatpush2.xpose.msra.mxu0 0.0
    %279 = vmatprep.subr.mxu0 0.0
    %280 = vmatpush2.xpose.msra.mxu0 0.0
    %281 = vmatprep.subr.mxu0 0.0
    %282 = vmatpush2.xpose.msra.mxu0 0.0
    %283 = vmatprep.subr.mxu0 0.0
    %284 = vmatpush2.xpose.msra.mxu0 0.0
    %285 = vmatprep.subr.mxu0 0.0
    %286 = vmatpush2.xpose.msra.mxu0 0.0
    %287 = vmatprep.subr.mxu0 0.0
    %288 = vmatpush2.xpose.msra.mxu0 0.0
    %289 = vmatprep.subr.mxu0 0.0
    %290 = vmatpush2.xpose.msra.mxu0 0.0
    %291 = vmatprep.subr.mxu0 0.0
    %292 = vmatpush2.xpose.msra.mxu0 0.0
    %293 = vmatprep.subr.mxu0 0.0
    %294 = vmatpush2.xpose.msra.mxu0 0.0
    %295 = vmatprep.subr.mxu0 0.0
    %296 = vmatpush2.xpose.msra.mxu0 0.0
    %297 = vmatprep.subr.mxu0 0.0
    %298 = vmatpush2.xpose.msra.mxu0 0.0
    %299 = vmatprep.subr.mxu0 0.0
    %300 = vmatpush2.xpose.msra.mxu0 0.0
    %301 = vmatprep.mubr.f32.mxu0 0.0
    %v302 = vand.u32 %v78, 4294901760
    %v303 = vsub.f32 %v78, %v302
    %304 = vmatmul.mubr.f32.gmra.mxu0 %v303
    %v305 = vpop.f32.mrf.mxu0
    %v306 = vadd.f32 %v232, %v305
    %v307 = vpop.f32.mrf.mxu0
    %308 = vdwg.mxu0
    %309 = vmatprep.subr.mxu0 0.0
    %310 = vmatpush1.xpose.msra.mxu0 0.0
    %311 = vmatprep.subr.mxu0 0.0
    %312 = vmatpush1.xpose.msra.mxu0 0.0
    %313 = vmatprep.subr.mxu0 0.0
    %314 = vmatpush1.xpose.msra.mxu0 0.0
    %315 = vmatprep.subr.mxu0 0.0
    %316 = vmatpush1.xpose.msra.mxu0 0.0
    %317 = vmatprep.subr.mxu0 0.0
    %318 = vmatpush1.xpose.msra.mxu0 0.0
    %319 = vmatprep.subr.mxu0 0.0
    %320 = vmatpush1.xpose.msra.mxu0 0.0
    %321 = vmatprep.subr.mxu0 0.0
    %322 = vmatpush1.xpose.msra.mxu0 0.0
    %323 = vmatprep.subr.mxu0 0.0
    %324 = vmatpush1.xpose.msra.mxu0 0.0
    %325 = vmatprep.subr.mxu0 0.0
    %326 = vmatpush1.xpose.msra.mxu0 0.0
    %327 = vmatprep.subr.mxu0 0.0
    %328 = vmatpush1.xpose.msra.mxu0 0.0
    %329 = vmatprep.subr.mxu0 0.0
    %330 = vmatpush1.xpose.msra.mxu0 0.0
    %331 = vmatprep.subr.mxu0 0.0
    %332 = vmatpush1.xpose.msra.mxu0 0.0
    %333 = vmatprep.subr.mxu0 0.0
    %334 = vmatpush1.xpose.msra.mxu0 0.0
    %335 = vmatprep.subr.mxu0 0.0
    %336 = vmatpush1.xpose.msra.mxu0 0.0
    %337 = vmatprep.subr.mxu0 0.0
    %338 = vmatpush1.xpose.msra.mxu0 0.0
    %339 = vmatprep.subr.mxu0 0.0
    %v340 = vand.u32 %v81, 4294901760
    %341 = vmatpush1.xpose.msra.mxu0 %v340
    %342 = vmatprep.subr.mxu0 0.0
    %343 = vmatpush2.xpose.msra.mxu0 0.0
    %344 = vmatprep.subr.mxu0 0.0
    %345 = vmatpush2.xpose.msra.mxu0 0.0
    %346 = vmatprep.subr.mxu0 0.0
    %347 = vmatpush2.xpose.msra.mxu0 0.0
    %348 = vmatprep.subr.mxu0 0.0
    %349 = vmatpush2.xpose.msra.mxu0 0.0
    %350 = vmatprep.subr.mxu0 0.0
    %351 = vmatpush2.xpose.msra.mxu0 0.0
    %352 = vmatprep.subr.mxu0 0.0
    %353 = vmatpush2.xpose.msra.mxu0 0.0
    %354 = vmatprep.subr.mxu0 0.0
    %355 = vmatpush2.xpose.msra.mxu0 0.0
    %356 = vmatprep.subr.mxu0 0.0
    %357 = vmatpush2.xpose.msra.mxu0 0.0
    %358 = vmatprep.subr.mxu0 0.0
    %359 = vmatpush2.xpose.msra.mxu0 0.0
    %360 = vmatprep.subr.mxu0 0.0
    %361 = vmatpush2.xpose.msra.mxu0 0.0
    %362 = vmatprep.subr.mxu0 0.0
    %363 = vmatpush2.xpose.msra.mxu0 0.0
    %364 = vmatprep.subr.mxu0 0.0
    %365 = vmatpush2.xpose.msra.mxu0 0.0
    %366 = vmatprep.subr.mxu0 0.0
    %367 = vmatpush2.xpose.msra.mxu0 0.0
    %368 = vmatprep.subr.mxu0 0.0
    %369 = vmatpush2.xpose.msra.mxu0 0.0
    %370 = vmatprep.subr.mxu0 0.0
    %371 = vmatpush2.xpose.msra.mxu0 0.0
    %372 = vmatprep.subr.mxu0 0.0
    %373 = vmatpush2.xpose.msra.mxu0 0.0
    %374 = vmatprep.mubr.f32.mxu0 0.0
    %v375 = vand.u32 %v78, 4294901760
    %v376 = vsub.f32 %v78, %v375
    %v377 = vand.u32 %v376, 4294901760
    %378 = vmatmul.mubr.f32.gmra.mxu0 %v377
    %v379 = vpop.f32.mrf.mxu0
    %v380 = vadd.f32 %v306, %v379
    %v381 = vpop.f32.mrf.mxu0
    %382 = vdwg.mxu0
    %383 = vmatprep.subr.mxu0 0.0
    %384 = vmatpush1.xpose.msra.mxu0 0.0
    %385 = vmatprep.subr.mxu0 0.0
    %386 = vmatpush1.xpose.msra.mxu0 0.0
    %387 = vmatprep.subr.mxu0 0.0
    %388 = vmatpush1.xpose.msra.mxu0 0.0
    %389 = vmatprep.subr.mxu0 0.0
    %390 = vmatpush1.xpose.msra.mxu0 0.0
    %391 = vmatprep.subr.mxu0 0.0
    %392 = vmatpush1.xpose.msra.mxu0 0.0
    %393 = vmatprep.subr.mxu0 0.0
    %394 = vmatpush1.xpose.msra.mxu0 0.0
    %395 = vmatprep.subr.mxu0 0.0
    %396 = vmatpush1.xpose.msra.mxu0 0.0
    %397 = vmatprep.subr.mxu0 0.0
    %398 = vmatpush1.xpose.msra.mxu0 0.0
    %399 = vmatprep.subr.mxu0 0.0
    %400 = vmatpush1.xpose.msra.mxu0 0.0
    %401 = vmatprep.subr.mxu0 0.0
    %402 = vmatpush1.xpose.msra.mxu0 0.0
    %403 = vmatprep.subr.mxu0 0.0
    %404 = vmatpush1.xpose.msra.mxu0 0.0
    %405 = vmatprep.subr.mxu0 0.0
    %406 = vmatpush1.xpose.msra.mxu0 0.0
    %407 = vmatprep.subr.mxu0 0.0
    %408 = vmatpush1.xpose.msra.mxu0 0.0
    %409 = vmatprep.subr.mxu0 0.0
    %410 = vmatpush1.xpose.msra.mxu0 0.0
    %411 = vmatprep.subr.mxu0 0.0
    %412 = vmatpush1.xpose.msra.mxu0 0.0
    %413 = vmatprep.subr.mxu0 0.0
    %v414 = vand.u32 %v81, 4294901760
    %v415 = vsub.f32 %v81, %v414
    %v416 = vand.u32 %v415, 4294901760
    %417 = vmatpush1.xpose.msra.mxu0 %v416
    %418 = vmatprep.subr.mxu0 0.0
    %419 = vmatpush2.xpose.msra.mxu0 0.0
    %420 = vmatprep.subr.mxu0 0.0
    %421 = vmatpush2.xpose.msra.mxu0 0.0
    %422 = vmatprep.subr.mxu0 0.0
    %423 = vmatpush2.xpose.msra.mxu0 0.0
    %424 = vmatprep.subr.mxu0 0.0
    %425 = vmatpush2.xpose.msra.mxu0 0.0
    %426 = vmatprep.subr.mxu0 0.0
    %427 = vmatpush2.xpose.msra.mxu0 0.0
    %428 = vmatprep.subr.mxu0 0.0
    %429 = vmatpush2.xpose.msra.mxu0 0.0
    %430 = vmatprep.subr.mxu0 0.0
    %431 = vmatpush2.xpose.msra.mxu0 0.0
    %432 = vmatprep.subr.mxu0 0.0
    %433 = vmatpush2.xpose.msra.mxu0 0.0
    %434 = vmatprep.subr.mxu0 0.0
    %435 = vmatpush2.xpose.msra.mxu0 0.0
    %436 = vmatprep.subr.mxu0 0.0
    %437 = vmatpush2.xpose.msra.mxu0 0.0
    %438 = vmatprep.subr.mxu0 0.0
    %439 = vmatpush2.xpose.msra.mxu0 0.0
    %440 = vmatprep.subr.mxu0 0.0
    %441 = vmatpush2.xpose.msra.mxu0 0.0
    %442 = vmatprep.subr.mxu0 0.0
    %443 = vmatpush2.xpose.msra.mxu0 0.0
    %444 = vmatprep.subr.mxu0 0.0
    %445 = vmatpush2.xpose.msra.mxu0 0.0
    %446 = vmatprep.subr.mxu0 0.0
    %447 = vmatpush2.xpose.msra.mxu0 0.0
    %448 = vmatprep.subr.mxu0 0.0
    %449 = vmatpush2.xpose.msra.mxu0 0.0
    %450 = vmatprep.mubr.f32.mxu0 0.0
    %v451 = vand.u32 %v78, 4294901760
    %452 = vmatmul.mubr.f32.gmra.mxu0 %v451
    %v453 = vpop.f32.mrf.mxu0
    %v454 = vadd.f32 %v380, %v453
    %v455 = vpop.f32.mrf.mxu0
    %456 = vdwg.mxu0
    %457 = vmatprep.subr.mxu0 0.0
    %458 = vmatpush1.xpose.msra.mxu0 0.0
    %459 = vmatprep.subr.mxu0 0.0
    %460 = vmatpush1.xpose.msra.mxu0 0.0
    %461 = vmatprep.subr.mxu0 0.0
    %462 = vmatpush1.xpose.msra.mxu0 0.0
    %463 = vmatprep.subr.mxu0 0.0
    %464 = vmatpush1.xpose.msra.mxu0 0.0
    %465 = vmatprep.subr.mxu0 0.0
    %466 = vmatpush1.xpose.msra.mxu0 0.0
    %467 = vmatprep.subr.mxu0 0.0
    %468 = vmatpush1.xpose.msra.mxu0 0.0
    %469 = vmatprep.subr.mxu0 0.0
    %470 = vmatpush1.xpose.msra.mxu0 0.0
    %471 = vmatprep.subr.mxu0 0.0
    %472 = vmatpush1.xpose.msra.mxu0 0.0
    %473 = vmatprep.subr.mxu0 0.0
    %474 = vmatpush1.xpose.msra.mxu0 0.0
    %475 = vmatprep.subr.mxu0 0.0
    %476 = vmatpush1.xpose.msra.mxu0 0.0
    %477 = vmatprep.subr.mxu0 0.0
    %478 = vmatpush1.xpose.msra.mxu0 0.0
    %479 = vmatprep.subr.mxu0 0.0
    %480 = vmatpush1.xpose.msra.mxu0 0.0
    %481 = vmatprep.subr.mxu0 0.0
    %482 = vmatpush1.xpose.msra.mxu0 0.0
    %483 = vmatprep.subr.mxu0 0.0
    %484 = vmatpush1.xpose.msra.mxu0 0.0
    %485 = vmatprep.subr.mxu0 0.0
    %486 = vmatpush1.xpose.msra.mxu0 0.0
    %487 = vmatprep.subr.mxu0 0.0
    %v488 = vand.u32 %v81, 4294901760
    %489 = vmatpush1.xpose.msra.mxu0 %v488
    %490 = vmatprep.subr.mxu0 0.0
    %491 = vmatpush2.xpose.msra.mxu0 0.0
    %492 = vmatprep.subr.mxu0 0.0
    %493 = vmatpush2.xpose.msra.mxu0 0.0
    %494 = vmatprep.subr.mxu0 0.0
    %495 = vmatpush2.xpose.msra.mxu0 0.0
    %496 = vmatprep.subr.mxu0 0.0
    %497 = vmatpush2.xpose.msra.mxu0 0.0
    %498 = vmatprep.subr.mxu0 0.0
    %499 = vmatpush2.xpose.msra.mxu0 0.0
    %500 = vmatprep.subr.mxu0 0.0
    %501 = vmatpush2.xpose.msra.mxu0 0.0
    %502 = vmatprep.subr.mxu0 0.0
    %503 = vmatpush2.xpose.msra.mxu0 0.0
    %504 = vmatprep.subr.mxu0 0.0
    %505 = vmatpush2.xpose.msra.mxu0 0.0
    %506 = vmatprep.subr.mxu0 0.0
    %507 = vmatpush2.xpose.msra.mxu0 0.0
    %508 = vmatprep.subr.mxu0 0.0
    %509 = vmatpush2.xpose.msra.mxu0 0.0
    %510 = vmatprep.subr.mxu0 0.0
    %511 = vmatpush2.xpose.msra.mxu0 0.0
    %512 = vmatprep.subr.mxu0 0.0
    %513 = vmatpush2.xpose.msra.mxu0 0.0
    %514 = vmatprep.subr.mxu0 0.0
    %515 = vmatpush2.xpose.msra.mxu0 0.0
    %516 = vmatprep.subr.mxu0 0.0
    %517 = vmatpush2.xpose.msra.mxu0 0.0
    %518 = vmatprep.subr.mxu0 0.0
    %519 = vmatpush2.xpose.msra.mxu0 0.0
    %520 = vmatprep.subr.mxu0 0.0
    %521 = vmatpush2.xpose.msra.mxu0 0.0
    %522 = vmatprep.mubr.f32.mxu0 0.0
    %v523 = vand.u32 %v78, 4294901760
    %524 = vmatmul.mubr.f32.gmra.mxu0 %v523
    %v525 = vpop.f32.mrf.mxu0
    %v526 = vadd.f32 %v454, %v525
    %v527 = vpop.f32.mrf.mxu0
    %528 = vdwg.mxu0
    %v530 = vsel %vm76, %v71, 0
    %v533 = vsel %vm76, %v73, 0
    %535 = vmatprep.subr.mxu0 0.0
    %536 = vmatpush1.xpose.msra.mxu0 0.0
    %537 = vmatprep.subr.mxu0 0.0
    %538 = vmatpush1.xpose.msra.mxu0 0.0
    %539 = vmatprep.subr.mxu0 0.0
    %540 = vmatpush1.xpose.msra.mxu0 0.0
    %541 = vmatprep.subr.mxu0 0.0
    %542 = vmatpush1.xpose.msra.mxu0 0.0
    %543 = vmatprep.subr.mxu0 0.0
    %544 = vmatpush1.xpose.msra.mxu0 0.0
    %545 = vmatprep.subr.mxu0 0.0
    %546 = vmatpush1.xpose.msra.mxu0 0.0
    %547 = vmatprep.subr.mxu0 0.0
    %548 = vmatpush1.xpose.msra.mxu0 0.0
    %549 = vmatprep.subr.mxu0 0.0
    %550 = vmatpush1.xpose.msra.mxu0 0.0
    %551 = vmatprep.subr.mxu0 0.0
    %552 = vmatpush1.xpose.msra.mxu0 0.0
    %553 = vmatprep.subr.mxu0 0.0
    %554 = vmatpush1.xpose.msra.mxu0 0.0
    %555 = vmatprep.subr.mxu0 0.0
    %556 = vmatpush1.xpose.msra.mxu0 0.0
    %557 = vmatprep.subr.mxu0 0.0
    %558 = vmatpush1.xpose.msra.mxu0 0.0
    %559 = vmatprep.subr.mxu0 0.0
    %560 = vmatpush1.xpose.msra.mxu0 0.0
    %561 = vmatprep.subr.mxu0 0.0
    %562 = vmatpush1.xpose.msra.mxu0 0.0
    %563 = vmatprep.subr.mxu0 0.0
    %564 = vmatpush1.xpose.msra.mxu0 0.0
    %565 = vmatprep.subr.mxu0 0.0
    %v566 = vand.u32 %v533, 4294901760
    %567 = vmatpush1.xpose.msra.mxu0 %v566
    %568 = vmatprep.subr.mxu0 0.0
    %569 = vmatpush2.xpose.msra.mxu0 0.0
    %570 = vmatprep.subr.mxu0 0.0
    %571 = vmatpush2.xpose.msra.mxu0 0.0
    %572 = vmatprep.subr.mxu0 0.0
    %573 = vmatpush2.xpose.msra.mxu0 0.0
    %574 = vmatprep.subr.mxu0 0.0
    %575 = vmatpush2.xpose.msra.mxu0 0.0
    %576 = vmatprep.subr.mxu0 0.0
    %577 = vmatpush2.xpose.msra.mxu0 0.0
    %578 = vmatprep.subr.mxu0 0.0
    %579 = vmatpush2.xpose.msra.mxu0 0.0
    %580 = vmatprep.subr.mxu0 0.0
    %581 = vmatpush2.xpose.msra.mxu0 0.0
    %582 = vmatprep.subr.mxu0 0.0
    %583 = vmatpush2.xpose.msra.mxu0 0.0
    %584 = vmatprep.subr.mxu0 0.0
    %585 = vmatpush2.xpose.msra.mxu0 0.0
    %586 = vmatprep.subr.mxu0 0.0
    %587 = vmatpush2.xpose.msra.mxu0 0.0
    %588 = vmatprep.subr.mxu0 0.0
    %589 = vmatpush2.xpose.msra.mxu0 0.0
    %590 = vmatprep.subr.mxu0 0.0
    %591 = vmatpush2.xpose.msra.mxu0 0.0
    %592 = vmatprep.subr.mxu0 0.0
    %593 = vmatpush2.xpose.msra.mxu0 0.0
    %594 = vmatprep.subr.mxu0 0.0
    %595 = vmatpush2.xpose.msra.mxu0 0.0
    %596 = vmatprep.subr.mxu0 0.0
    %597 = vmatpush2.xpose.msra.mxu0 0.0
    %598 = vmatprep.subr.mxu0 0.0
    %599 = vmatpush2.xpose.msra.mxu0 0.0
    %600 = vmatprep.mubr.f32.mxu0 0.0
    %v601 = vand.u32 %v530, 4294901760
    %v602 = vsub.f32 %v530, %v601
    %v603 = vand.u32 %v602, 4294901760
    %v604 = vsub.f32 %v602, %v603
    %v605 = vand.u32 %v604, 4294901760
    %606 = vmatmul.mubr.f32.gmra.mxu0 %v605
    %v607 = vpop.f32.mrf.mxu0
    %v608 = vadd.f32 0.0, %v607
    %v609 = vpop.f32.mrf.mxu0
    %610 = vdwg.mxu0
    %611 = vmatprep.subr.mxu0 0.0
    %612 = vmatpush1.xpose.msra.mxu0 0.0
    %613 = vmatprep.subr.mxu0 0.0
    %614 = vmatpush1.xpose.msra.mxu0 0.0
    %615 = vmatprep.subr.mxu0 0.0
    %616 = vmatpush1.xpose.msra.mxu0 0.0
    %617 = vmatprep.subr.mxu0 0.0
    %618 = vmatpush1.xpose.msra.mxu0 0.0
    %619 = vmatprep.subr.mxu0 0.0
    %620 = vmatpush1.xpose.msra.mxu0 0.0
    %621 = vmatprep.subr.mxu0 0.0
    %622 = vmatpush1.xpose.msra.mxu0 0.0
    %623 = vmatprep.subr.mxu0 0.0
    %624 = vmatpush1.xpose.msra.mxu0 0.0
    %625 = vmatprep.subr.mxu0 0.0
    %626 = vmatpush1.xpose.msra.mxu0 0.0
    %627 = vmatprep.subr.mxu0 0.0
    %628 = vmatpush1.xpose.msra.mxu0 0.0
    %629 = vmatprep.subr.mxu0 0.0
    %630 = vmatpush1.xpose.msra.mxu0 0.0
    %631 = vmatprep.subr.mxu0 0.0
    %632 = vmatpush1.xpose.msra.mxu0 0.0
    %633 = vmatprep.subr.mxu0 0.0
    %634 = vmatpush1.xpose.msra.mxu0 0.0
    %635 = vmatprep.subr.mxu0 0.0
    %636 = vmatpush1.xpose.msra.mxu0 0.0
    %637 = vmatprep.subr.mxu0 0.0
    %638 = vmatpush1.xpose.msra.mxu0 0.0
    %639 = vmatprep.subr.mxu0 0.0
    %640 = vmatpush1.xpose.msra.mxu0 0.0
    %641 = vmatprep.subr.mxu0 0.0
    %v642 = vand.u32 %v533, 4294901760
    %v643 = vsub.f32 %v533, %v642
    %v644 = vand.u32 %v643, 4294901760
    %v645 = vsub.f32 %v643, %v644
    %v646 = vand.u32 %v645, 4294901760
    %647 = vmatpush1.xpose.msra.mxu0 %v646
    %648 = vmatprep.subr.mxu0 0.0
    %649 = vmatpush2.xpose.msra.mxu0 0.0
    %650 = vmatprep.subr.mxu0 0.0
    %651 = vmatpush2.xpose.msra.mxu0 0.0
    %652 = vmatprep.subr.mxu0 0.0
    %653 = vmatpush2.xpose.msra.mxu0 0.0
    %654 = vmatprep.subr.mxu0 0.0
    %655 = vmatpush2.xpose.msra.mxu0 0.0
    %656 = vmatprep.subr.mxu0 0.0
    %657 = vmatpush2.xpose.msra.mxu0 0.0
    %658 = vmatprep.subr.mxu0 0.0
    %659 = vmatpush2.xpose.msra.mxu0 0.0
    %660 = vmatprep.subr.mxu0 0.0
    %661 = vmatpush2.xpose.msra.mxu0 0.0
    %662 = vmatprep.subr.mxu0 0.0
    %663 = vmatpush2.xpose.msra.mxu0 0.0
    %664 = vmatprep.subr.mxu0 0.0
    %665 = vmatpush2.xpose.msra.mxu0 0.0
    %666 = vmatprep.subr.mxu0 0.0
    %667 = vmatpush2.xpose.msra.mxu0 0.0
    %668 = vmatprep.subr.mxu0 0.0
    %669 = vmatpush2.xpose.msra.mxu0 0.0
    %670 = vmatprep.subr.mxu0 0.0
    %671 = vmatpush2.xpose.msra.mxu0 0.0
    %672 = vmatprep.subr.mxu0 0.0
    %673 = vmatpush2.xpose.msra.mxu0 0.0
    %674 = vmatprep.subr.mxu0 0.0
    %675 = vmatpush2.xpose.msra.mxu0 0.0
    %676 = vmatprep.subr.mxu0 0.0
    %677 = vmatpush2.xpose.msra.mxu0 0.0
    %678 = vmatprep.subr.mxu0 0.0
    %679 = vmatpush2.xpose.msra.mxu0 0.0
    %680 = vmatprep.mubr.f32.mxu0 0.0
    %v681 = vand.u32 %v530, 4294901760
    %682 = vmatmul.mubr.f32.gmra.mxu0 %v681
    %v683 = vpop.f32.mrf.mxu0
    %v684 = vadd.f32 %v608, %v683
    %v685 = vpop.f32.mrf.mxu0
    %686 = vdwg.mxu0
    %687 = vmatprep.subr.mxu0 0.0
    %688 = vmatpush1.xpose.msra.mxu0 0.0
    %689 = vmatprep.subr.mxu0 0.0
    %690 = vmatpush1.xpose.msra.mxu0 0.0
    %691 = vmatprep.subr.mxu0 0.0
    %692 = vmatpush1.xpose.msra.mxu0 0.0
    %693 = vmatprep.subr.mxu0 0.0
    %694 = vmatpush1.xpose.msra.mxu0 0.0
    %695 = vmatprep.subr.mxu0 0.0
    %696 = vmatpush1.xpose.msra.mxu0 0.0
    %697 = vmatprep.subr.mxu0 0.0
    %698 = vmatpush1.xpose.msra.mxu0 0.0
    %699 = vmatprep.subr.mxu0 0.0
    %700 = vmatpush1.xpose.msra.mxu0 0.0
    %701 = vmatprep.subr.mxu0 0.0
    %702 = vmatpush1.xpose.msra.mxu0 0.0
    %703 = vmatprep.subr.mxu0 0.0
    %704 = vmatpush1.xpose.msra.mxu0 0.0
    %705 = vmatprep.subr.mxu0 0.0
    %706 = vmatpush1.xpose.msra.mxu0 0.0
    %707 = vmatprep.subr.mxu0 0.0
    %708 = vmatpush1.xpose.msra.mxu0 0.0
    %709 = vmatprep.subr.mxu0 0.0
    %710 = vmatpush1.xpose.msra.mxu0 0.0
    %711 = vmatprep.subr.mxu0 0.0
    %712 = vmatpush1.xpose.msra.mxu0 0.0
    %713 = vmatprep.subr.mxu0 0.0
    %714 = vmatpush1.xpose.msra.mxu0 0.0
    %715 = vmatprep.subr.mxu0 0.0
    %716 = vmatpush1.xpose.msra.mxu0 0.0
    %717 = vmatprep.subr.mxu0 0.0
    %v718 = vand.u32 %v533, 4294901760
    %v719 = vsub.f32 %v533, %v718
    %720 = vmatpush1.xpose.msra.mxu0 %v719
    %721 = vmatprep.subr.mxu0 0.0
    %722 = vmatpush2.xpose.msra.mxu0 0.0
    %723 = vmatprep.subr.mxu0 0.0
    %724 = vmatpush2.xpose.msra.mxu0 0.0
    %725 = vmatprep.subr.mxu0 0.0
    %726 = vmatpush2.xpose.msra.mxu0 0.0
    %727 = vmatprep.subr.mxu0 0.0
    %728 = vmatpush2.xpose.msra.mxu0 0.0
    %729 = vmatprep.subr.mxu0 0.0
    %730 = vmatpush2.xpose.msra.mxu0 0.0
    %731 = vmatprep.subr.mxu0 0.0
    %732 = vmatpush2.xpose.msra.mxu0 0.0
    %733 = vmatprep.subr.mxu0 0.0
    %734 = vmatpush2.xpose.msra.mxu0 0.0
    %735 = vmatprep.subr.mxu0 0.0
    %736 = vmatpush2.xpose.msra.mxu0 0.0
    %737 = vmatprep.subr.mxu0 0.0
    %738 = vmatpush2.xpose.msra.mxu0 0.0
    %739 = vmatprep.subr.mxu0 0.0
    %740 = vmatpush2.xpose.msra.mxu0 0.0
    %741 = vmatprep.subr.mxu0 0.0
    %742 = vmatpush2.xpose.msra.mxu0 0.0
    %743 = vmatprep.subr.mxu0 0.0
    %744 = vmatpush2.xpose.msra.mxu0 0.0
    %745 = vmatprep.subr.mxu0 0.0
    %746 = vmatpush2.xpose.msra.mxu0 0.0
    %747 = vmatprep.subr.mxu0 0.0
    %748 = vmatpush2.xpose.msra.mxu0 0.0
    %749 = vmatprep.subr.mxu0 0.0
    %750 = vmatpush2.xpose.msra.mxu0 0.0
    %751 = vmatprep.subr.mxu0 0.0
    %752 = vmatpush2.xpose.msra.mxu0 0.0
    %753 = vmatprep.mubr.f32.mxu0 0.0
    %v754 = vand.u32 %v530, 4294901760
    %v755 = vsub.f32 %v530, %v754
    %756 = vmatmul.mubr.f32.gmra.mxu0 %v755
    %v757 = vpop.f32.mrf.mxu0
    %v758 = vadd.f32 %v684, %v757
    %v759 = vpop.f32.mrf.mxu0
    %760 = vdwg.mxu0
    %761 = vmatprep.subr.mxu0 0.0
    %762 = vmatpush1.xpose.msra.mxu0 0.0
    %763 = vmatprep.subr.mxu0 0.0
    %764 = vmatpush1.xpose.msra.mxu0 0.0
    %765 = vmatprep.subr.mxu0 0.0
    %766 = vmatpush1.xpose.msra.mxu0 0.0
    %767 = vmatprep.subr.mxu0 0.0
    %768 = vmatpush1.xpose.msra.mxu0 0.0
    %769 = vmatprep.subr.mxu0 0.0
    %770 = vmatpush1.xpose.msra.mxu0 0.0
    %771 = vmatprep.subr.mxu0 0.0
    %772 = vmatpush1.xpose.msra.mxu0 0.0
    %773 = vmatprep.subr.mxu0 0.0
    %774 = vmatpush1.xpose.msra.mxu0 0.0
    %775 = vmatprep.subr.mxu0 0.0
    %776 = vmatpush1.xpose.msra.mxu0 0.0
    %777 = vmatprep.subr.mxu0 0.0
    %778 = vmatpush1.xpose.msra.mxu0 0.0
    %779 = vmatprep.subr.mxu0 0.0
    %780 = vmatpush1.xpose.msra.mxu0 0.0
    %781 = vmatprep.subr.mxu0 0.0
    %782 = vmatpush1.xpose.msra.mxu0 0.0
    %783 = vmatprep.subr.mxu0 0.0
    %784 = vmatpush1.xpose.msra.mxu0 0.0
    %785 = vmatprep.subr.mxu0 0.0
    %786 = vmatpush1.xpose.msra.mxu0 0.0
    %787 = vmatprep.subr.mxu0 0.0
    %788 = vmatpush1.xpose.msra.mxu0 0.0
    %789 = vmatprep.subr.mxu0 0.0
    %790 = vmatpush1.xpose.msra.mxu0 0.0
    %791 = vmatprep.subr.mxu0 0.0
    %v792 = vand.u32 %v533, 4294901760
    %793 = vmatpush1.xpose.msra.mxu0 %v792
    %794 = vmatprep.subr.mxu0 0.0
    %795 = vmatpush2.xpose.msra.mxu0 0.0
    %796 = vmatprep.subr.mxu0 0.0
    %797 = vmatpush2.xpose.msra.mxu0 0.0
    %798 = vmatprep.subr.mxu0 0.0
    %799 = vmatpush2.xpose.msra.mxu0 0.0
    %800 = vmatprep.subr.mxu0 0.0
    %801 = vmatpush2.xpose.msra.mxu0 0.0
    %802 = vmatprep.subr.mxu0 0.0
    %803 = vmatpush2.xpose.msra.mxu0 0.0
    %804 = vmatprep.subr.mxu0 0.0
    %805 = vmatpush2.xpose.msra.mxu0 0.0
    %806 = vmatprep.subr.mxu0 0.0
    %807 = vmatpush2.xpose.msra.mxu0 0.0
    %808 = vmatprep.subr.mxu0 0.0
    %809 = vmatpush2.xpose.msra.mxu0 0.0
    %810 = vmatprep.subr.mxu0 0.0
    %811 = vmatpush2.xpose.msra.mxu0 0.0
    %812 = vmatprep.subr.mxu0 0.0
    %813 = vmatpush2.xpose.msra.mxu0 0.0
    %814 = vmatprep.subr.mxu0 0.0
    %815 = vmatpush2.xpose.msra.mxu0 0.0
    %816 = vmatprep.subr.mxu0 0.0
    %817 = vmatpush2.xpose.msra.mxu0 0.0
    %818 = vmatprep.subr.mxu0 0.0
    %819 = vmatpush2.xpose.msra.mxu0 0.0
    %820 = vmatprep.subr.mxu0 0.0
    %821 = vmatpush2.xpose.msra.mxu0 0.0
    %822 = vmatprep.subr.mxu0 0.0
    %823 = vmatpush2.xpose.msra.mxu0 0.0
    %824 = vmatprep.subr.mxu0 0.0
    %825 = vmatpush2.xpose.msra.mxu0 0.0
    %826 = vmatprep.mubr.f32.mxu0 0.0
    %v827 = vand.u32 %v530, 4294901760
    %v828 = vsub.f32 %v530, %v827
    %v829 = vand.u32 %v828, 4294901760
    %830 = vmatmul.mubr.f32.gmra.mxu0 %v829
    %v831 = vpop.f32.mrf.mxu0
    %v832 = vadd.f32 %v758, %v831
    %v833 = vpop.f32.mrf.mxu0
    %834 = vdwg.mxu0
    %835 = vmatprep.subr.mxu0 0.0
    %836 = vmatpush1.xpose.msra.mxu0 0.0
    %837 = vmatprep.subr.mxu0 0.0
    %838 = vmatpush1.xpose.msra.mxu0 0.0
    %839 = vmatprep.subr.mxu0 0.0
    %840 = vmatpush1.xpose.msra.mxu0 0.0
    %841 = vmatprep.subr.mxu0 0.0
    %842 = vmatpush1.xpose.msra.mxu0 0.0
    %843 = vmatprep.subr.mxu0 0.0
    %844 = vmatpush1.xpose.msra.mxu0 0.0
    %845 = vmatprep.subr.mxu0 0.0
    %846 = vmatpush1.xpose.msra.mxu0 0.0
    %847 = vmatprep.subr.mxu0 0.0
    %848 = vmatpush1.xpose.msra.mxu0 0.0
    %849 = vmatprep.subr.mxu0 0.0
    %850 = vmatpush1.xpose.msra.mxu0 0.0
    %851 = vmatprep.subr.mxu0 0.0
    %852 = vmatpush1.xpose.msra.mxu0 0.0
    %853 = vmatprep.subr.mxu0 0.0
    %854 = vmatpush1.xpose.msra.mxu0 0.0
    %855 = vmatprep.subr.mxu0 0.0
    %856 = vmatpush1.xpose.msra.mxu0 0.0
    %857 = vmatprep.subr.mxu0 0.0
    %858 = vmatpush1.xpose.msra.mxu0 0.0
    %859 = vmatprep.subr.mxu0 0.0
    %860 = vmatpush1.xpose.msra.mxu0 0.0
    %861 = vmatprep.subr.mxu0 0.0
    %862 = vmatpush1.xpose.msra.mxu0 0.0
    %863 = vmatprep.subr.mxu0 0.0
    %864 = vmatpush1.xpose.msra.mxu0 0.0
    %865 = vmatprep.subr.mxu0 0.0
    %v866 = vand.u32 %v533, 4294901760
    %v867 = vsub.f32 %v533, %v866
    %v868 = vand.u32 %v867, 4294901760
    %869 = vmatpush1.xpose.msra.mxu0 %v868
    %870 = vmatprep.subr.mxu0 0.0
    %871 = vmatpush2.xpose.msra.mxu0 0.0
    %872 = vmatprep.subr.mxu0 0.0
    %873 = vmatpush2.xpose.msra.mxu0 0.0
    %874 = vmatprep.subr.mxu0 0.0
    %875 = vmatpush2.xpose.msra.mxu0 0.0
    %876 = vmatprep.subr.mxu0 0.0
    %877 = vmatpush2.xpose.msra.mxu0 0.0
    %878 = vmatprep.subr.mxu0 0.0
    %879 = vmatpush2.xpose.msra.mxu0 0.0
    %880 = vmatprep.subr.mxu0 0.0
    %881 = vmatpush2.xpose.msra.mxu0 0.0
    %882 = vmatprep.subr.mxu0 0.0
    %883 = vmatpush2.xpose.msra.mxu0 0.0
    %884 = vmatprep.subr.mxu0 0.0
    %885 = vmatpush2.xpose.msra.mxu0 0.0
    %886 = vmatprep.subr.mxu0 0.0
    %887 = vmatpush2.xpose.msra.mxu0 0.0
    %888 = vmatprep.subr.mxu0 0.0
    %889 = vmatpush2.xpose.msra.mxu0 0.0
    %890 = vmatprep.subr.mxu0 0.0
    %891 = vmatpush2.xpose.msra.mxu0 0.0
    %892 = vmatprep.subr.mxu0 0.0
    %893 = vmatpush2.xpose.msra.mxu0 0.0
    %894 = vmatprep.subr.mxu0 0.0
    %895 = vmatpush2.xpose.msra.mxu0 0.0
    %896 = vmatprep.subr.mxu0 0.0
    %897 = vmatpush2.xpose.msra.mxu0 0.0
    %898 = vmatprep.subr.mxu0 0.0
    %899 = vmatpush2.xpose.msra.mxu0 0.0
    %900 = vmatprep.subr.mxu0 0.0
    %901 = vmatpush2.xpose.msra.mxu0 0.0
    %902 = vmatprep.mubr.f32.mxu0 0.0
    %v903 = vand.u32 %v530, 4294901760
    %904 = vmatmul.mubr.f32.gmra.mxu0 %v903
    %v905 = vpop.f32.mrf.mxu0
    %v906 = vadd.f32 %v832, %v905
    %v907 = vpop.f32.mrf.mxu0
    %908 = vdwg.mxu0
    %909 = vmatprep.subr.mxu0 0.0
    %910 = vmatpush1.xpose.msra.mxu0 0.0
    %911 = vmatprep.subr.mxu0 0.0
    %912 = vmatpush1.xpose.msra.mxu0 0.0
    %913 = vmatprep.subr.mxu0 0.0
    %914 = vmatpush1.xpose.msra.mxu0 0.0
    %915 = vmatprep.subr.mxu0 0.0
    %916 = vmatpush1.xpose.msra.mxu0 0.0
    %917 = vmatprep.subr.mxu0 0.0
    %918 = vmatpush1.xpose.msra.mxu0 0.0
    %919 = vmatprep.subr.mxu0 0.0
    %920 = vmatpush1.xpose.msra.mxu0 0.0
    %921 = vmatprep.subr.mxu0 0.0
    %922 = vmatpush1.xpose.msra.mxu0 0.0
    %923 = vmatprep.subr.mxu0 0.0
    %924 = vmatpush1.xpose.msra.mxu0 0.0
    %925 = vmatprep.subr.mxu0 0.0
    %926 = vmatpush1.xpose.msra.mxu0 0.0
    %927 = vmatprep.subr.mxu0 0.0
    %928 = vmatpush1.xpose.msra.mxu0 0.0
    %929 = vmatprep.subr.mxu0 0.0
    %930 = vmatpush1.xpose.msra.mxu0 0.0
    %931 = vmatprep.subr.mxu0 0.0
    %932 = vmatpush1.xpose.msra.mxu0 0.0
    %933 = vmatprep.subr.mxu0 0.0
    %934 = vmatpush1.xpose.msra.mxu0 0.0
    %935 = vmatprep.subr.mxu0 0.0
    %936 = vmatpush1.xpose.msra.mxu0 0.0
    %937 = vmatprep.subr.mxu0 0.0
    %938 = vmatpush1.xpose.msra.mxu0 0.0
    %939 = vmatprep.subr.mxu0 0.0
    %v940 = vand.u32 %v533, 4294901760
    %941 = vmatpush1.xpose.msra.mxu0 %v940
    %942 = vmatprep.subr.mxu0 0.0
    %943 = vmatpush2.xpose.msra.mxu0 0.0
    %944 = vmatprep.subr.mxu0 0.0
    %945 = vmatpush2.xpose.msra.mxu0 0.0
    %946 = vmatprep.subr.mxu0 0.0
    %947 = vmatpush2.xpose.msra.mxu0 0.0
    %948 = vmatprep.subr.mxu0 0.0
    %949 = vmatpush2.xpose.msra.mxu0 0.0
    %950 = vmatprep.subr.mxu0 0.0
    %951 = vmatpush2.xpose.msra.mxu0 0.0
    %952 = vmatprep.subr.mxu0 0.0
    %953 = vmatpush2.xpose.msra.mxu0 0.0
    %954 = vmatprep.subr.mxu0 0.0
    %955 = vmatpush2.xpose.msra.mxu0 0.0
    %956 = vmatprep.subr.mxu0 0.0
    %957 = vmatpush2.xpose.msra.mxu0 0.0
    %958 = vmatprep.subr.mxu0 0.0
    %959 = vmatpush2.xpose.msra.mxu0 0.0
    %960 = vmatprep.subr.mxu0 0.0
    %961 = vmatpush2.xpose.msra.mxu0 0.0
    %962 = vmatprep.subr.mxu0 0.0
    %963 = vmatpush2.xpose.msra.mxu0 0.0
    %964 = vmatprep.subr.mxu0 0.0
    %965 = vmatpush2.xpose.msra.mxu0 0.0
    %966 = vmatprep.subr.mxu0 0.0
    %967 = vmatpush2.xpose.msra.mxu0 0.0
    %968 = vmatprep.subr.mxu0 0.0
    %969 = vmatpush2.xpose.msra.mxu0 0.0
    %970 = vmatprep.subr.mxu0 0.0
    %971 = vmatpush2.xpose.msra.mxu0 0.0
    %972 = vmatprep.subr.mxu0 0.0
    %973 = vmatpush2.xpose.msra.mxu0 0.0
    %974 = vmatprep.mubr.f32.mxu0 0.0
    %v975 = vand.u32 %v530, 4294901760
    %976 = vmatmul.mubr.f32.gmra.mxu0 %v975
    %v977 = vpop.f32.mrf.mxu0
    %v978 = vadd.f32 %v906, %v977
    %v979 = vpop.f32.mrf.mxu0
    %980 = vdwg.mxu0
    %v981 = vld [vmem:[#allocation2] sm:$0xff]
    %v982 = vld [vmem:[#allocation2 + $0x8] sm:$0xff]
    %vm983 = vcmask 64512
    %v984 = vsel %vm983, %v526, -inf
    %985 = vmax.xlane.f32.xlu0 %v984
    %v986 = vpop.xlane.xlu0 %985
    %v987 = vsel %vm983, %v978, -inf
    %988 = vmax.xlane.f32.xlu0 %v987
    %v989 = vpop.xlane.xlu0 %988
    %v990 = vmax.f32 %v981, %v986
    %v991 = vmax.f32 %v982, %v989
    %v992 = vsub.f32 %v981, %v990
    %v993 = vsub.f32 %v982, %v991
    %v994 = vmul.f32 %v992, 1.442695
    %v995 = vpow.pop %v994
    %v996 = vmul.f32 %v993, 1.442695
    %v997 = vpow.pop %v996
    %999 = vset.pattern.permute.xlu0 0
    %1000 = vperm.xlu0 %999, %v990
    %v1001 = vpop.permute.xlu0 %1000
    %1004 = vset.pattern.permute.xlu0 0
    %1005 = vperm.xlu0 %1004, %v991
    %v1006 = vpop.permute.xlu0 %1005
    %v1008 = vsub.f32 %v526, %v1001
    %v1009 = vsub.f32 %v978, %v1006
    %v1010 = vmul.f32 %v1008, 1.442695
    %v1011 = vpow.pop %v1010
    %v1012 = vmul.f32 %v1009, 1.442695
    %v1013 = vpow.pop %v1012
    %v1014 = vld [vmem:[#allocation3] sm:$0xff]
    %v1015 = vld [vmem:[#allocation3 + $0x8] sm:$0xff]
    %v1016 = vmul.f32 %v995, %v1014
    %v1017 = vmul.f32 %v997, %v1015
    %v1018 = vsel %vm983, %v1011, 0.0
    %1019 = vadd.xlane.f32.xlu0 %v1018
    %v1020 = vpop.xlane.xlu0 %1019
    %v1021 = vsel %vm983, %v1013, 0.0
    %1022 = vadd.xlane.f32.xlu0 %v1021
    %v1023 = vpop.xlane.xlu0 %1022
    %v1024 = vadd.f32 %v1016, %v1020
    %v1025 = vadd.f32 %v1017, %v1023
    %vm1026 = vcmask 7168
    %1027 = vst.msk [vmem:[#allocation3] sm:$0xff] %vm1026, %v1024
    %1028 = vst.msk [vmem:[#allocation3 + $0x8] sm:$0xff] %vm1026, %v1025
    %v1030 = vsel %vm983, %v1011, 0
    %1032 = vmatprep.subr.mxu0 0.0
    %1033 = vmatpush1.msra.mxu0 0.0
    %1034 = vmatprep.subr.mxu0 0.0
    %1035 = vmatpush1.msra.mxu0 0.0
    %1036 = vmatprep.subr.mxu0 0.0
    %1037 = vmatpush1.msra.mxu0 0.0
    %1038 = vmatprep.subr.mxu0 0.0
    %1039 = vmatpush1.msra.mxu0 0.0
    %1040 = vmatprep.subr.mxu0 0.0
    %1041 = vmatpush1.msra.mxu0 0.0
    %1042 = vmatprep.subr.mxu0 0.0
    %1043 = vmatpush1.msra.mxu0 0.0
    %1044 = vmatprep.subr.mxu0 0.0
    %1045 = vmatpush1.msra.mxu0 0.0
    %1046 = vmatprep.subr.mxu0 0.0
    %1047 = vmatpush1.msra.mxu0 0.0
    %1048 = vmatprep.subr.mxu0 0.0
    %1049 = vmatpush1.msra.mxu0 0.0
    %1050 = vmatprep.subr.mxu0 0.0
    %1051 = vmatpush1.msra.mxu0 0.0
    %1052 = vmatprep.subr.mxu0 0.0
    %1053 = vmatpush1.msra.mxu0 0.0
    %1054 = vmatprep.subr.mxu0 0.0
    %1055 = vmatpush1.msra.mxu0 0.0
    %1056 = vmatprep.subr.mxu0 0.0
    %1057 = vmatpush1.msra.mxu0 0.0
    %1058 = vmatprep.subr.mxu0 0.0
    %1059 = vmatpush1.msra.mxu0 0.0
    %1060 = vmatprep.subr.mxu0 0.0
    %1061 = vmatpush1.msra.mxu0 0.0
    %1062 = vmatprep.subr.mxu0 0.0
    %v1063 = vand.u32 %v74, 4294901760
    %1064 = vmatpush1.msra.mxu0 %v1063
    %1065 = vmatprep.subr.mxu0 0.0
    %1066 = vmatpush2.msra.mxu0 0.0
    %1067 = vmatprep.subr.mxu0 0.0
    %1068 = vmatpush2.msra.mxu0 0.0
    %1069 = vmatprep.subr.mxu0 0.0
    %1070 = vmatpush2.msra.mxu0 0.0
    %1071 = vmatprep.subr.mxu0 0.0
    %1072 = vmatpush2.msra.mxu0 0.0
    %1073 = vmatprep.subr.mxu0 0.0
    %1074 = vmatpush2.msra.mxu0 0.0
    %1075 = vmatprep.subr.mxu0 0.0
    %1076 = vmatpush2.msra.mxu0 0.0
    %1077 = vmatprep.subr.mxu0 0.0
    %1078 = vmatpush2.msra.mxu0 0.0
    %1079 = vmatprep.subr.mxu0 0.0
    %1080 = vmatpush2.msra.mxu0 0.0
    %1081 = vmatprep.subr.mxu0 0.0
    %1082 = vmatpush2.msra.mxu0 0.0
    %1083 = vmatprep.subr.mxu0 0.0
    %1084 = vmatpush2.msra.mxu0 0.0
    %1085 = vmatprep.subr.mxu0 0.0
    %1086 = vmatpush2.msra.mxu0 0.0
    %1087 = vmatprep.subr.mxu0 0.0
    %1088 = vmatpush2.msra.mxu0 0.0
    %1089 = vmatprep.subr.mxu0 0.0
    %1090 = vmatpush2.msra.mxu0 0.0
    %1091 = vmatprep.subr.mxu0 0.0
    %1092 = vmatpush2.msra.mxu0 0.0
    %1093 = vmatprep.subr.mxu0 0.0
    %1094 = vmatpush2.msra.mxu0 0.0
    %1095 = vmatprep.subr.mxu0 0.0
    %1096 = vmatpush2.msra.mxu0 0.0
    %1097 = vmatprep.mubr.f32.mxu0 0.0
    %v1098 = vand.u32 %v1030, 4294901760
    %v1099 = vsub.f32 %v1030, %v1098
    %v1100 = vand.u32 %v1099, 4294901760
    %v1101 = vsub.f32 %v1099, %v1100
    %v1102 = vand.u32 %v1101, 4294901760
    %1103 = vmatmul.mubr.f32.gmra.mxu0 %v1102
    %v1104 = vpop.f32.mrf.mxu0
    %v1105 = vadd.f32 0.0, %v1104
    %v1106 = vpop.f32.mrf.mxu0
    %1107 = vdwg.mxu0
    %1108 = vmatprep.subr.mxu0 0.0
    %1109 = vmatpush1.msra.mxu0 0.0
    %1110 = vmatprep.subr.mxu0 0.0
    %1111 = vmatpush1.msra.mxu0 0.0
    %1112 = vmatprep.subr.mxu0 0.0
    %1113 = vmatpush1.msra.mxu0 0.0
    %1114 = vmatprep.subr.mxu0 0.0
    %1115 = vmatpush1.msra.mxu0 0.0
    %1116 = vmatprep.subr.mxu0 0.0
    %1117 = vmatpush1.msra.mxu0 0.0
    %1118 = vmatprep.subr.mxu0 0.0
    %1119 = vmatpush1.msra.mxu0 0.0
    %1120 = vmatprep.subr.mxu0 0.0
    %1121 = vmatpush1.msra.mxu0 0.0
    %1122 = vmatprep.subr.mxu0 0.0
    %1123 = vmatpush1.msra.mxu0 0.0
    %1124 = vmatprep.subr.mxu0 0.0
    %1125 = vmatpush1.msra.mxu0 0.0
    %1126 = vmatprep.subr.mxu0 0.0
    %1127 = vmatpush1.msra.mxu0 0.0
    %1128 = vmatprep.subr.mxu0 0.0
    %1129 = vmatpush1.msra.mxu0 0.0
    %1130 = vmatprep.subr.mxu0 0.0
    %1131 = vmatpush1.msra.mxu0 0.0
    %1132 = vmatprep.subr.mxu0 0.0
    %1133 = vmatpush1.msra.mxu0 0.0
    %1134 = vmatprep.subr.mxu0 0.0
    %1135 = vmatpush1.msra.mxu0 0.0
    %1136 = vmatprep.subr.mxu0 0.0
    %1137 = vmatpush1.msra.mxu0 0.0
    %1138 = vmatprep.subr.mxu0 0.0
    %v1139 = vand.u32 %v74, 4294901760
    %v1140 = vsub.f32 %v74, %v1139
    %v1141 = vand.u32 %v1140, 4294901760
    %v1142 = vsub.f32 %v1140, %v1141
    %v1143 = vand.u32 %v1142, 4294901760
    %1144 = vmatpush1.msra.mxu0 %v1143
    %1145 = vmatprep.subr.mxu0 0.0
    %1146 = vmatpush2.msra.mxu0 0.0
    %1147 = vmatprep.subr.mxu0 0.0
    %1148 = vmatpush2.msra.mxu0 0.0
    %1149 = vmatprep.subr.mxu0 0.0
    %1150 = vmatpush2.msra.mxu0 0.0
    %1151 = vmatprep.subr.mxu0 0.0
    %1152 = vmatpush2.msra.mxu0 0.0
    %1153 = vmatprep.subr.mxu0 0.0
    %1154 = vmatpush2.msra.mxu0 0.0
    %1155 = vmatprep.subr.mxu0 0.0
    %1156 = vmatpush2.msra.mxu0 0.0
    %1157 = vmatprep.subr.mxu0 0.0
    %1158 = vmatpush2.msra.mxu0 0.0
    %1159 = vmatprep.subr.mxu0 0.0
    %1160 = vmatpush2.msra.mxu0 0.0
    %1161 = vmatprep.subr.mxu0 0.0
    %1162 = vmatpush2.msra.mxu0 0.0
    %1163 = vmatprep.subr.mxu0 0.0
    %1164 = vmatpush2.msra.mxu0 0.0
    %1165 = vmatprep.subr.mxu0 0.0
    %1166 = vmatpush2.msra.mxu0 0.0
    %1167 = vmatprep.subr.mxu0 0.0
    %1168 = vmatpush2.msra.mxu0 0.0
    %1169 = vmatprep.subr.mxu0 0.0
    %1170 = vmatpush2.msra.mxu0 0.0
    %1171 = vmatprep.subr.mxu0 0.0
    %1172 = vmatpush2.msra.mxu0 0.0
    %1173 = vmatprep.subr.mxu0 0.0
    %1174 = vmatpush2.msra.mxu0 0.0
    %1175 = vmatprep.subr.mxu0 0.0
    %1176 = vmatpush2.msra.mxu0 0.0
    %1177 = vmatprep.mubr.f32.mxu0 0.0
    %v1178 = vand.u32 %v1030, 4294901760
    %1179 = vmatmul.mubr.f32.gmra.mxu0 %v1178
    %v1180 = vpop.f32.mrf.mxu0
    %v1181 = vadd.f32 %v1105, %v1180
    %v1182 = vpop.f32.mrf.mxu0
    %1183 = vdwg.mxu0
    %1184 = vmatprep.subr.mxu0 0.0
    %1185 = vmatpush1.msra.mxu0 0.0
    %1186 = vmatprep.subr.mxu0 0.0
    %1187 = vmatpush1.msra.mxu0 0.0
    %1188 = vmatprep.subr.mxu0 0.0
    %1189 = vmatpush1.msra.mxu0 0.0
    %1190 = vmatprep.subr.mxu0 0.0
    %1191 = vmatpush1.msra.mxu0 0.0
    %1192 = vmatprep.subr.mxu0 0.0
    %1193 = vmatpush1.msra.mxu0 0.0
    %1194 = vmatprep.subr.mxu0 0.0
    %1195 = vmatpush1.msra.mxu0 0.0
    %1196 = vmatprep.subr.mxu0 0.0
    %1197 = vmatpush1.msra.mxu0 0.0
    %1198 = vmatprep.subr.mxu0 0.0
    %1199 = vmatpush1.msra.mxu0 0.0
    %1200 = vmatprep.subr.mxu0 0.0
    %1201 = vmatpush1.msra.mxu0 0.0
    %1202 = vmatprep.subr.mxu0 0.0
    %1203 = vmatpush1.msra.mxu0 0.0
    %1204 = vmatprep.subr.mxu0 0.0
    %1205 = vmatpush1.msra.mxu0 0.0
    %1206 = vmatprep.subr.mxu0 0.0
    %1207 = vmatpush1.msra.mxu0 0.0
    %1208 = vmatprep.subr.mxu0 0.0
    %1209 = vmatpush1.msra.mxu0 0.0
    %1210 = vmatprep.subr.mxu0 0.0
    %1211 = vmatpush1.msra.mxu0 0.0
    %1212 = vmatprep.subr.mxu0 0.0
    %1213 = vmatpush1.msra.mxu0 0.0
    %1214 = vmatprep.subr.mxu0 0.0
    %v1215 = vand.u32 %v74, 4294901760
    %v1216 = vsub.f32 %v74, %v1215
    %1217 = vmatpush1.msra.mxu0 %v1216
    %1218 = vmatprep.subr.mxu0 0.0
    %1219 = vmatpush2.msra.mxu0 0.0
    %1220 = vmatprep.subr.mxu0 0.0
    %1221 = vmatpush2.msra.mxu0 0.0
    %1222 = vmatprep.subr.mxu0 0.0
    %1223 = vmatpush2.msra.mxu0 0.0
    %1224 = vmatprep.subr.mxu0 0.0
    %1225 = vmatpush2.msra.mxu0 0.0
    %1226 = vmatprep.subr.mxu0 0.0
    %1227 = vmatpush2.msra.mxu0 0.0
    %1228 = vmatprep.subr.mxu0 0.0
    %1229 = vmatpush2.msra.mxu0 0.0
    %1230 = vmatprep.subr.mxu0 0.0
    %1231 = vmatpush2.msra.mxu0 0.0
    %1232 = vmatprep.subr.mxu0 0.0
    %1233 = vmatpush2.msra.mxu0 0.0
    %1234 = vmatprep.subr.mxu0 0.0
    %1235 = vmatpush2.msra.mxu0 0.0
    %1236 = vmatprep.subr.mxu0 0.0
    %1237 = vmatpush2.msra.mxu0 0.0
    %1238 = vmatprep.subr.mxu0 0.0
    %1239 = vmatpush2.msra.mxu0 0.0
    %1240 = vmatprep.subr.mxu0 0.0
    %1241 = vmatpush2.msra.mxu0 0.0
    %1242 = vmatprep.subr.mxu0 0.0
    %1243 = vmatpush2.msra.mxu0 0.0
    %1244 = vmatprep.subr.mxu0 0.0
    %1245 = vmatpush2.msra.mxu0 0.0
    %1246 = vmatprep.subr.mxu0 0.0
    %1247 = vmatpush2.msra.mxu0 0.0
    %1248 = vmatprep.subr.mxu0 0.0
    %1249 = vmatpush2.msra.mxu0 0.0
    %1250 = vmatprep.mubr.f32.mxu0 0.0
    %v1251 = vand.u32 %v1030, 4294901760
    %v1252 = vsub.f32 %v1030, %v1251
    %1253 = vmatmul.mubr.f32.gmra.mxu0 %v1252
    %v1254 = vpop.f32.mrf.mxu0
    %v1255 = vadd.f32 %v1181, %v1254
    %v1256 = vpop.f32.mrf.mxu0
    %1257 = vdwg.mxu0
    %1258 = vmatprep.subr.mxu0 0.0
    %1259 = vmatpush1.msra.mxu0 0.0
    %1260 = vmatprep.subr.mxu0 0.0
    %1261 = vmatpush1.msra.mxu0 0.0
    %1262 = vmatprep.subr.mxu0 0.0
    %1263 = vmatpush1.msra.mxu0 0.0
    %1264 = vmatprep.subr.mxu0 0.0
    %1265 = vmatpush1.msra.mxu0 0.0
    %1266 = vmatprep.subr.mxu0 0.0
    %1267 = vmatpush1.msra.mxu0 0.0
    %1268 = vmatprep.subr.mxu0 0.0
    %1269 = vmatpush1.msra.mxu0 0.0
    %1270 = vmatprep.subr.mxu0 0.0
    %1271 = vmatpush1.msra.mxu0 0.0
    %1272 = vmatprep.subr.mxu0 0.0
    %1273 = vmatpush1.msra.mxu0 0.0
    %1274 = vmatprep.subr.mxu0 0.0
    %1275 = vmatpush1.msra.mxu0 0.0
    %1276 = vmatprep.subr.mxu0 0.0
    %1277 = vmatpush1.msra.mxu0 0.0
    %1278 = vmatprep.subr.mxu0 0.0
    %1279 = vmatpush1.msra.mxu0 0.0
    %1280 = vmatprep.subr.mxu0 0.0
    %1281 = vmatpush1.msra.mxu0 0.0
    %1282 = vmatprep.subr.mxu0 0.0
    %1283 = vmatpush1.msra.mxu0 0.0
    %1284 = vmatprep.subr.mxu0 0.0
    %1285 = vmatpush1.msra.mxu0 0.0
    %1286 = vmatprep.subr.mxu0 0.0
    %1287 = vmatpush1.msra.mxu0 0.0
    %1288 = vmatprep.subr.mxu0 0.0
    %v1289 = vand.u32 %v74, 4294901760
    %1290 = vmatpush1.msra.mxu0 %v1289
    %1291 = vmatprep.subr.mxu0 0.0
    %1292 = vmatpush2.msra.mxu0 0.0
    %1293 = vmatprep.subr.mxu0 0.0
    %1294 = vmatpush2.msra.mxu0 0.0
    %1295 = vmatprep.subr.mxu0 0.0
    %1296 = vmatpush2.msra.mxu0 0.0
    %1297 = vmatprep.subr.mxu0 0.0
    %1298 = vmatpush2.msra.mxu0 0.0
    %1299 = vmatprep.subr.mxu0 0.0
    %1300 = vmatpush2.msra.mxu0 0.0
    %1301 = vmatprep.subr.mxu0 0.0
    %1302 = vmatpush2.msra.mxu0 0.0
    %1303 = vmatprep.subr.mxu0 0.0
    %1304 = vmatpush2.msra.mxu0 0.0
    %1305 = vmatprep.subr.mxu0 0.0
    %1306 = vmatpush2.msra.mxu0 0.0
    %1307 = vmatprep.subr.mxu0 0.0
    %1308 = vmatpush2.msra.mxu0 0.0
    %1309 = vmatprep.subr.mxu0 0.0
    %1310 = vmatpush2.msra.mxu0 0.0
    %1311 = vmatprep.subr.mxu0 0.0
    %1312 = vmatpush2.msra.mxu0 0.0
    %1313 = vmatprep.subr.mxu0 0.0
    %1314 = vmatpush2.msra.mxu0 0.0
    %1315 = vmatprep.subr.mxu0 0.0
    %1316 = vmatpush2.msra.mxu0 0.0
    %1317 = vmatprep.subr.mxu0 0.0
    %1318 = vmatpush2.msra.mxu0 0.0
    %1319 = vmatprep.subr.mxu0 0.0
    %1320 = vmatpush2.msra.mxu0 0.0
    %1321 = vmatprep.subr.mxu0 0.0
    %1322 = vmatpush2.msra.mxu0 0.0
    %1323 = vmatprep.mubr.f32.mxu0 0.0
    %v1324 = vand.u32 %v1030, 4294901760
    %v1325 = vsub.f32 %v1030, %v1324
    %v1326 = vand.u32 %v1325, 4294901760
    %1327 = vmatmul.mubr.f32.gmra.mxu0 %v1326
    %v1328 = vpop.f32.mrf.mxu0
    %v1329 = vadd.f32 %v1255, %v1328
    %v1330 = vpop.f32.mrf.mxu0
    %1331 = vdwg.mxu0
    %1332 = vmatprep.subr.mxu0 0.0
    %1333 = vmatpush1.msra.mxu0 0.0
    %1334 = vmatprep.subr.mxu0 0.0
    %1335 = vmatpush1.msra.mxu0 0.0
    %1336 = vmatprep.subr.mxu0 0.0
    %1337 = vmatpush1.msra.mxu0 0.0
    %1338 = vmatprep.subr.mxu0 0.0
    %1339 = vmatpush1.msra.mxu0 0.0
    %1340 = vmatprep.subr.mxu0 0.0
    %1341 = vmatpush1.msra.mxu0 0.0
    %1342 = vmatprep.subr.mxu0 0.0
    %1343 = vmatpush1.msra.mxu0 0.0
    %1344 = vmatprep.subr.mxu0 0.0
    %1345 = vmatpush1.msra.mxu0 0.0
    %1346 = vmatprep.subr.mxu0 0.0
    %1347 = vmatpush1.msra.mxu0 0.0
    %1348 = vmatprep.subr.mxu0 0.0
    %1349 = vmatpush1.msra.mxu0 0.0
    %1350 = vmatprep.subr.mxu0 0.0
    %1351 = vmatpush1.msra.mxu0 0.0
    %1352 = vmatprep.subr.mxu0 0.0
    %1353 = vmatpush1.msra.mxu0 0.0
    %1354 = vmatprep.subr.mxu0 0.0
    %1355 = vmatpush1.msra.mxu0 0.0
    %1356 = vmatprep.subr.mxu0 0.0
    %1357 = vmatpush1.msra.mxu0 0.0
    %1358 = vmatprep.subr.mxu0 0.0
    %1359 = vmatpush1.msra.mxu0 0.0
    %1360 = vmatprep.subr.mxu0 0.0
    %1361 = vmatpush1.msra.mxu0 0.0
    %1362 = vmatprep.subr.mxu0 0.0
    %v1363 = vand.u32 %v74, 4294901760
    %v1364 = vsub.f32 %v74, %v1363
    %v1365 = vand.u32 %v1364, 4294901760
    %1366 = vmatpush1.msra.mxu0 %v1365
    %1367 = vmatprep.subr.mxu0 0.0
    %1368 = vmatpush2.msra.mxu0 0.0
    %1369 = vmatprep.subr.mxu0 0.0
    %1370 = vmatpush2.msra.mxu0 0.0
    %1371 = vmatprep.subr.mxu0 0.0
    %1372 = vmatpush2.msra.mxu0 0.0
    %1373 = vmatprep.subr.mxu0 0.0
    %1374 = vmatpush2.msra.mxu0 0.0
    %1375 = vmatprep.subr.mxu0 0.0
    %1376 = vmatpush2.msra.mxu0 0.0
    %1377 = vmatprep.subr.mxu0 0.0
    %1378 = vmatpush2.msra.mxu0 0.0
    %1379 = vmatprep.subr.mxu0 0.0
    %1380 = vmatpush2.msra.mxu0 0.0
    %1381 = vmatprep.subr.mxu0 0.0
    %1382 = vmatpush2.msra.mxu0 0.0
    %1383 = vmatprep.subr.mxu0 0.0
    %1384 = vmatpush2.msra.mxu0 0.0
    %1385 = vmatprep.subr.mxu0 0.0
    %1386 = vmatpush2.msra.mxu0 0.0
    %1387 = vmatprep.subr.mxu0 0.0
    %1388 = vmatpush2.msra.mxu0 0.0
    %1389 = vmatprep.subr.mxu0 0.0
    %1390 = vmatpush2.msra.mxu0 0.0
    %1391 = vmatprep.subr.mxu0 0.0
    %1392 = vmatpush2.msra.mxu0 0.0
    %1393 = vmatprep.subr.mxu0 0.0
    %1394 = vmatpush2.msra.mxu0 0.0
    %1395 = vmatprep.subr.mxu0 0.0
    %1396 = vmatpush2.msra.mxu0 0.0
    %1397 = vmatprep.subr.mxu0 0.0
    %1398 = vmatpush2.msra.mxu0 0.0
    %1399 = vmatprep.mubr.f32.mxu0 0.0
    %v1400 = vand.u32 %v1030, 4294901760
    %1401 = vmatmul.mubr.f32.gmra.mxu0 %v1400
    %v1402 = vpop.f32.mrf.mxu0
    %v1403 = vadd.f32 %v1329, %v1402
    %v1404 = vpop.f32.mrf.mxu0
    %1405 = vdwg.mxu0
    %1406 = vmatprep.subr.mxu0 0.0
    %1407 = vmatpush1.msra.mxu0 0.0
    %1408 = vmatprep.subr.mxu0 0.0
    %1409 = vmatpush1.msra.mxu0 0.0
    %1410 = vmatprep.subr.mxu0 0.0
    %1411 = vmatpush1.msra.mxu0 0.0
    %1412 = vmatprep.subr.mxu0 0.0
    %1413 = vmatpush1.msra.mxu0 0.0
    %1414 = vmatprep.subr.mxu0 0.0
    %1415 = vmatpush1.msra.mxu0 0.0
    %1416 = vmatprep.subr.mxu0 0.0
    %1417 = vmatpush1.msra.mxu0 0.0
    %1418 = vmatprep.subr.mxu0 0.0
    %1419 = vmatpush1.msra.mxu0 0.0
    %1420 = vmatprep.subr.mxu0 0.0
    %1421 = vmatpush1.msra.mxu0 0.0
    %1422 = vmatprep.subr.mxu0 0.0
    %1423 = vmatpush1.msra.mxu0 0.0
    %1424 = vmatprep.subr.mxu0 0.0
    %1425 = vmatpush1.msra.mxu0 0.0
    %1426 = vmatprep.subr.mxu0 0.0
    %1427 = vmatpush1.msra.mxu0 0.0
    %1428 = vmatprep.subr.mxu0 0.0
    %1429 = vmatpush1.msra.mxu0 0.0
    %1430 = vmatprep.subr.mxu0 0.0
    %1431 = vmatpush1.msra.mxu0 0.0
    %1432 = vmatprep.subr.mxu0 0.0
    %1433 = vmatpush1.msra.mxu0 0.0
    %1434 = vmatprep.subr.mxu0 0.0
    %1435 = vmatpush1.msra.mxu0 0.0
    %1436 = vmatprep.subr.mxu0 0.0
    %v1437 = vand.u32 %v74, 4294901760
    %1438 = vmatpush1.msra.mxu0 %v1437
    %1439 = vmatprep.subr.mxu0 0.0
    %1440 = vmatpush2.msra.mxu0 0.0
    %1441 = vmatprep.subr.mxu0 0.0
    %1442 = vmatpush2.msra.mxu0 0.0
    %1443 = vmatprep.subr.mxu0 0.0
    %1444 = vmatpush2.msra.mxu0 0.0
    %1445 = vmatprep.subr.mxu0 0.0
    %1446 = vmatpush2.msra.mxu0 0.0
    %1447 = vmatprep.subr.mxu0 0.0
    %1448 = vmatpush2.msra.mxu0 0.0
    %1449 = vmatprep.subr.mxu0 0.0
    %1450 = vmatpush2.msra.mxu0 0.0
    %1451 = vmatprep.subr.mxu0 0.0
    %1452 = vmatpush2.msra.mxu0 0.0
    %1453 = vmatprep.subr.mxu0 0.0
    %1454 = vmatpush2.msra.mxu0 0.0
    %1455 = vmatprep.subr.mxu0 0.0
    %1456 = vmatpush2.msra.mxu0 0.0
    %1457 = vmatprep.subr.mxu0 0.0
    %1458 = vmatpush2.msra.mxu0 0.0
    %1459 = vmatprep.subr.mxu0 0.0
    %1460 = vmatpush2.msra.mxu0 0.0
    %1461 = vmatprep.subr.mxu0 0.0
    %1462 = vmatpush2.msra.mxu0 0.0
    %1463 = vmatprep.subr.mxu0 0.0
    %1464 = vmatpush2.msra.mxu0 0.0
    %1465 = vmatprep.subr.mxu0 0.0
    %1466 = vmatpush2.msra.mxu0 0.0
    %1467 = vmatprep.subr.mxu0 0.0
    %1468 = vmatpush2.msra.mxu0 0.0
    %1469 = vmatprep.subr.mxu0 0.0
    %1470 = vmatpush2.msra.mxu0 0.0
    %1471 = vmatprep.mubr.f32.mxu0 0.0
    %v1472 = vand.u32 %v1030, 4294901760
    %1473 = vmatmul.mubr.f32.gmra.mxu0 %v1472
    %v1474 = vpop.f32.mrf.mxu0
    %v1475 = vadd.f32 %v1403, %v1474
    %v1476 = vpop.f32.mrf.mxu0
    %1477 = vdwg.mxu0
    %v1479 = vsel %vm983, %v1013, 0
    %1481 = vmatprep.subr.mxu0 0.0
    %1482 = vmatpush1.msra.mxu0 0.0
    %1483 = vmatprep.subr.mxu0 0.0
    %1484 = vmatpush1.msra.mxu0 0.0
    %1485 = vmatprep.subr.mxu0 0.0
    %1486 = vmatpush1.msra.mxu0 0.0
    %1487 = vmatprep.subr.mxu0 0.0
    %1488 = vmatpush1.msra.mxu0 0.0
    %1489 = vmatprep.subr.mxu0 0.0
    %1490 = vmatpush1.msra.mxu0 0.0
    %1491 = vmatprep.subr.mxu0 0.0
    %1492 = vmatpush1.msra.mxu0 0.0
    %1493 = vmatprep.subr.mxu0 0.0
    %1494 = vmatpush1.msra.mxu0 0.0
    %1495 = vmatprep.subr.mxu0 0.0
    %1496 = vmatpush1.msra.mxu0 0.0
    %1497 = vmatprep.subr.mxu0 0.0
    %1498 = vmatpush1.msra.mxu0 0.0
    %1499 = vmatprep.subr.mxu0 0.0
    %1500 = vmatpush1.msra.mxu0 0.0
    %1501 = vmatprep.subr.mxu0 0.0
    %1502 = vmatpush1.msra.mxu0 0.0
    %1503 = vmatprep.subr.mxu0 0.0
    %1504 = vmatpush1.msra.mxu0 0.0
    %1505 = vmatprep.subr.mxu0 0.0
    %1506 = vmatpush1.msra.mxu0 0.0
    %1507 = vmatprep.subr.mxu0 0.0
    %1508 = vmatpush1.msra.mxu0 0.0
    %1509 = vmatprep.subr.mxu0 0.0
    %1510 = vmatpush1.msra.mxu0 0.0
    %1511 = vmatprep.subr.mxu0 0.0
    %v1512 = vand.u32 %v75, 4294901760
    %1513 = vmatpush1.msra.mxu0 %v1512
    %1514 = vmatprep.subr.mxu0 0.0
    %1515 = vmatpush2.msra.mxu0 0.0
    %1516 = vmatprep.subr.mxu0 0.0
    %1517 = vmatpush2.msra.mxu0 0.0
    %1518 = vmatprep.subr.mxu0 0.0
    %1519 = vmatpush2.msra.mxu0 0.0
    %1520 = vmatprep.subr.mxu0 0.0
    %1521 = vmatpush2.msra.mxu0 0.0
    %1522 = vmatprep.subr.mxu0 0.0
    %1523 = vmatpush2.msra.mxu0 0.0
    %1524 = vmatprep.subr.mxu0 0.0
    %1525 = vmatpush2.msra.mxu0 0.0
    %1526 = vmatprep.subr.mxu0 0.0
    %1527 = vmatpush2.msra.mxu0 0.0
    %1528 = vmatprep.subr.mxu0 0.0
    %1529 = vmatpush2.msra.mxu0 0.0
    %1530 = vmatprep.subr.mxu0 0.0
    %1531 = vmatpush2.msra.mxu0 0.0
    %1532 = vmatprep.subr.mxu0 0.0
    %1533 = vmatpush2.msra.mxu0 0.0
    %1534 = vmatprep.subr.mxu0 0.0
    %1535 = vmatpush2.msra.mxu0 0.0
    %1536 = vmatprep.subr.mxu0 0.0
    %1537 = vmatpush2.msra.mxu0 0.0
    %1538 = vmatprep.subr.mxu0 0.0
    %1539 = vmatpush2.msra.mxu0 0.0
    %1540 = vmatprep.subr.mxu0 0.0
    %1541 = vmatpush2.msra.mxu0 0.0
    %1542 = vmatprep.subr.mxu0 0.0
    %1543 = vmatpush2.msra.mxu0 0.0
    %1544 = vmatprep.subr.mxu0 0.0
    %1545 = vmatpush2.msra.mxu0 0.0
    %1546 = vmatprep.mubr.f32.mxu0 0.0
    %v1547 = vand.u32 %v1479, 4294901760
    %v1548 = vsub.f32 %v1479, %v1547
    %v1549 = vand.u32 %v1548, 4294901760
    %v1550 = vsub.f32 %v1548, %v1549
    %v1551 = vand.u32 %v1550, 4294901760
    %1552 = vmatmul.mubr.f32.gmra.mxu0 %v1551
    %v1553 = vpop.f32.mrf.mxu0
    %v1554 = vadd.f32 0.0, %v1553
    %v1555 = vpop.f32.mrf.mxu0
    %1556 = vdwg.mxu0
    %1557 = vmatprep.subr.mxu0 0.0
    %1558 = vmatpush1.msra.mxu0 0.0
    %1559 = vmatprep.subr.mxu0 0.0
    %1560 = vmatpush1.msra.mxu0 0.0
    %1561 = vmatprep.subr.mxu0 0.0
    %1562 = vmatpush1.msra.mxu0 0.0
    %1563 = vmatprep.subr.mxu0 0.0
    %1564 = vmatpush1.msra.mxu0 0.0
    %1565 = vmatprep.subr.mxu0 0.0
    %1566 = vmatpush1.msra.mxu0 0.0
    %1567 = vmatprep.subr.mxu0 0.0
    %1568 = vmatpush1.msra.mxu0 0.0
    %1569 = vmatprep.subr.mxu0 0.0
    %1570 = vmatpush1.msra.mxu0 0.0
    %1571 = vmatprep.subr.mxu0 0.0
    %1572 = vmatpush1.msra.mxu0 0.0
    %1573 = vmatprep.subr.mxu0 0.0
    %1574 = vmatpush1.msra.mxu0 0.0
    %1575 = vmatprep.subr.mxu0 0.0
    %1576 = vmatpush1.msra.mxu0 0.0
    %1577 = vmatprep.subr.mxu0 0.0
    %1578 = vmatpush1.msra.mxu0 0.0
    %1579 = vmatprep.subr.mxu0 0.0
    %1580 = vmatpush1.msra.mxu0 0.0
    %1581 = vmatprep.subr.mxu0 0.0
    %1582 = vmatpush1.msra.mxu0 0.0
    %1583 = vmatprep.subr.mxu0 0.0
    %1584 = vmatpush1.msra.mxu0 0.0
    %1585 = vmatprep.subr.mxu0 0.0
    %1586 = vmatpush1.msra.mxu0 0.0
    %1587 = vmatprep.subr.mxu0 0.0
    %v1588 = vand.u32 %v75, 4294901760
    %v1589 = vsub.f32 %v75, %v1588
    %v1590 = vand.u32 %v1589, 4294901760
    %v1591 = vsub.f32 %v1589, %v1590
    %v1592 = vand.u32 %v1591, 4294901760
    %1593 = vmatpush1.msra.mxu0 %v1592
    %1594 = vmatprep.subr.mxu0 0.0
    %1595 = vmatpush2.msra.mxu0 0.0
    %1596 = vmatprep.subr.mxu0 0.0
    %1597 = vmatpush2.msra.mxu0 0.0
    %1598 = vmatprep.subr.mxu0 0.0
    %1599 = vmatpush2.msra.mxu0 0.0
    %1600 = vmatprep.subr.mxu0 0.0
    %1601 = vmatpush2.msra.mxu0 0.0
    %1602 = vmatprep.subr.mxu0 0.0
    %1603 = vmatpush2.msra.mxu0 0.0
    %1604 = vmatprep.subr.mxu0 0.0
    %1605 = vmatpush2.msra.mxu0 0.0
    %1606 = vmatprep.subr.mxu0 0.0
    %1607 = vmatpush2.msra.mxu0 0.0
    %1608 = vmatprep.subr.mxu0 0.0
    %1609 = vmatpush2.msra.mxu0 0.0
    %1610 = vmatprep.subr.mxu0 0.0
    %1611 = vmatpush2.msra.mxu0 0.0
    %1612 = vmatprep.subr.mxu0 0.0
    %1613 = vmatpush2.msra.mxu0 0.0
    %1614 = vmatprep.subr.mxu0 0.0
    %1615 = vmatpush2.msra.mxu0 0.0
    %1616 = vmatprep.subr.mxu0 0.0
    %1617 = vmatpush2.msra.mxu0 0.0
    %1618 = vmatprep.subr.mxu0 0.0
    %1619 = vmatpush2.msra.mxu0 0.0
    %1620 = vmatprep.subr.mxu0 0.0
    %1621 = vmatpush2.msra.mxu0 0.0
    %1622 = vmatprep.subr.mxu0 0.0
    %1623 = vmatpush2.msra.mxu0 0.0
    %1624 = vmatprep.subr.mxu0 0.0
    %1625 = vmatpush2.msra.mxu0 0.0
    %1626 = vmatprep.mubr.f32.mxu0 0.0
    %v1627 = vand.u32 %v1479, 4294901760
    %1628 = vmatmul.mubr.f32.gmra.mxu0 %v1627
    %v1629 = vpop.f32.mrf.mxu0
    %v1630 = vadd.f32 %v1554, %v1629
    %v1631 = vpop.f32.mrf.mxu0
    %1632 = vdwg.mxu0
    %1633 = vmatprep.subr.mxu0 0.0
    %1634 = vmatpush1.msra.mxu0 0.0
    %1635 = vmatprep.subr.mxu0 0.0
    %1636 = vmatpush1.msra.mxu0 0.0
    %1637 = vmatprep.subr.mxu0 0.0
    %1638 = vmatpush1.msra.mxu0 0.0
    %1639 = vmatprep.subr.mxu0 0.0
    %1640 = vmatpush1.msra.mxu0 0.0
    %1641 = vmatprep.subr.mxu0 0.0
    %1642 = vmatpush1.msra.mxu0 0.0
    %1643 = vmatprep.subr.mxu0 0.0
    %1644 = vmatpush1.msra.mxu0 0.0
    %1645 = vmatprep.subr.mxu0 0.0
    %1646 = vmatpush1.msra.mxu0 0.0
    %1647 = vmatprep.subr.mxu0 0.0
    %1648 = vmatpush1.msra.mxu0 0.0
    %1649 = vmatprep.subr.mxu0 0.0
    %1650 = vmatpush1.msra.mxu0 0.0
    %1651 = vmatprep.subr.mxu0 0.0
    %1652 = vmatpush1.msra.mxu0 0.0
    %1653 = vmatprep.subr.mxu0 0.0
    %1654 = vmatpush1.msra.mxu0 0.0
    %1655 = vmatprep.subr.mxu0 0.0
    %1656 = vmatpush1.msra.mxu0 0.0
    %1657 = vmatprep.subr.mxu0 0.0
    %1658 = vmatpush1.msra.mxu0 0.0
    %1659 = vmatprep.subr.mxu0 0.0
    %1660 = vmatpush1.msra.mxu0 0.0
    %1661 = vmatprep.subr.mxu0 0.0
    %1662 = vmatpush1.msra.mxu0 0.0
    %1663 = vmatprep.subr.mxu0 0.0
    %v1664 = vand.u32 %v75, 4294901760
    %v1665 = vsub.f32 %v75, %v1664
    %1666 = vmatpush1.msra.mxu0 %v1665
    %1667 = vmatprep.subr.mxu0 0.0
    %1668 = vmatpush2.msra.mxu0 0.0
    %1669 = vmatprep.subr.mxu0 0.0
    %1670 = vmatpush2.msra.mxu0 0.0
    %1671 = vmatprep.subr.mxu0 0.0
    %1672 = vmatpush2.msra.mxu0 0.0
    %1673 = vmatprep.subr.mxu0 0.0
    %1674 = vmatpush2.msra.mxu0 0.0
    %1675 = vmatprep.subr.mxu0 0.0
    %1676 = vmatpush2.msra.mxu0 0.0
    %1677 = vmatprep.subr.mxu0 0.0
    %1678 = vmatpush2.msra.mxu0 0.0
    %1679 = vmatprep.subr.mxu0 0.0
    %1680 = vmatpush2.msra.mxu0 0.0
    %1681 = vmatprep.subr.mxu0 0.0
    %1682 = vmatpush2.msra.mxu0 0.0
    %1683 = vmatprep.subr.mxu0 0.0
    %1684 = vmatpush2.msra.mxu0 0.0
    %1685 = vmatprep.subr.mxu0 0.0
    %1686 = vmatpush2.msra.mxu0 0.0
    %1687 = vmatprep.subr.mxu0 0.0
    %1688 = vmatpush2.msra.mxu0 0.0
    %1689 = vmatprep.subr.mxu0 0.0
    %1690 = vmatpush2.msra.mxu0 0.0
    %1691 = vmatprep.subr.mxu0 0.0
    %1692 = vmatpush2.msra.mxu0 0.0
    %1693 = vmatprep.subr.mxu0 0.0
    %1694 = vmatpush2.msra.mxu0 0.0
    %1695 = vmatprep.subr.mxu0 0.0
    %1696 = vmatpush2.msra.mxu0 0.0
    %1697 = vmatprep.subr.mxu0 0.0
    %1698 = vmatpush2.msra.mxu0 0.0
    %1699 = vmatprep.mubr.f32.mxu0 0.0
    %v1700 = vand.u32 %v1479, 4294901760
    %v1701 = vsub.f32 %v1479, %v1700
    %1702 = vmatmul.mubr.f32.gmra.mxu0 %v1701
    %v1703 = vpop.f32.mrf.mxu0
    %v1704 = vadd.f32 %v1630, %v1703
    %v1705 = vpop.f32.mrf.mxu0
    %1706 = vdwg.mxu0
    %1707 = vmatprep.subr.mxu0 0.0
    %1708 = vmatpush1.msra.mxu0 0.0
    %1709 = vmatprep.subr.mxu0 0.0
    %1710 = vmatpush1.msra.mxu0 0.0
    %1711 = vmatprep.subr.mxu0 0.0
    %1712 = vmatpush1.msra.mxu0 0.0
    %1713 = vmatprep.subr.mxu0 0.0
    %1714 = vmatpush1.msra.mxu0 0.0
    %1715 = vmatprep.subr.mxu0 0.0
    %1716 = vmatpush1.msra.mxu0 0.0
    %1717 = vmatprep.subr.mxu0 0.0
    %1718 = vmatpush1.msra.mxu0 0.0
    %1719 = vmatprep.subr.mxu0 0.0
    %1720 = vmatpush1.msra.mxu0 0.0
    %1721 = vmatprep.subr.mxu0 0.0
    %1722 = vmatpush1.msra.mxu0 0.0
    %1723 = vmatprep.subr.mxu0 0.0
    %1724 = vmatpush1.msra.mxu0 0.0
    %1725 = vmatprep.subr.mxu0 0.0
    %1726 = vmatpush1.msra.mxu0 0.0
    %1727 = vmatprep.subr.mxu0 0.0
    %1728 = vmatpush1.msra.mxu0 0.0
    %1729 = vmatprep.subr.mxu0 0.0
    %1730 = vmatpush1.msra.mxu0 0.0
    %1731 = vmatprep.subr.mxu0 0.0
    %1732 = vmatpush1.msra.mxu0 0.0
    %1733 = vmatprep.subr.mxu0 0.0
    %1734 = vmatpush1.msra.mxu0 0.0
    %1735 = vmatprep.subr.mxu0 0.0
    %1736 = vmatpush1.msra.mxu0 0.0
    %1737 = vmatprep.subr.mxu0 0.0
    %v1738 = vand.u32 %v75, 4294901760
    %1739 = vmatpush1.msra.mxu0 %v1738
    %1740 = vmatprep.subr.mxu0 0.0
    %1741 = vmatpush2.msra.mxu0 0.0
    %1742 = vmatprep.subr.mxu0 0.0
    %1743 = vmatpush2.msra.mxu0 0.0
    %1744 = vmatprep.subr.mxu0 0.0
    %1745 = vmatpush2.msra.mxu0 0.0
    %1746 = vmatprep.subr.mxu0 0.0
    %1747 = vmatpush2.msra.mxu0 0.0
    %1748 = vmatprep.subr.mxu0 0.0
    %1749 = vmatpush2.msra.mxu0 0.0
    %1750 = vmatprep.subr.mxu0 0.0
    %1751 = vmatpush2.msra.mxu0 0.0
    %1752 = vmatprep.subr.mxu0 0.0
    %1753 = vmatpush2.msra.mxu0 0.0
    %1754 = vmatprep.subr.mxu0 0.0
    %1755 = vmatpush2.msra.mxu0 0.0
    %1756 = vmatprep.subr.mxu0 0.0
    %1757 = vmatpush2.msra.mxu0 0.0
    %1758 = vmatprep.subr.mxu0 0.0
    %1759 = vmatpush2.msra.mxu0 0.0
    %1760 = vmatprep.subr.mxu0 0.0
    %1761 = vmatpush2.msra.mxu0 0.0
    %1762 = vmatprep.subr.mxu0 0.0
    %1763 = vmatpush2.msra.mxu0 0.0
    %1764 = vmatprep.subr.mxu0 0.0
    %1765 = vmatpush2.msra.mxu0 0.0
    %1766 = vmatprep.subr.mxu0 0.0
    %1767 = vmatpush2.msra.mxu0 0.0
    %1768 = vmatprep.subr.mxu0 0.0
    %1769 = vmatpush2.msra.mxu0 0.0
    %1770 = vmatprep.subr.mxu0 0.0
    %1771 = vmatpush2.msra.mxu0 0.0
    %1772 = vmatprep.mubr.f32.mxu0 0.0
    %v1773 = vand.u32 %v1479, 4294901760
    %v1774 = vsub.f32 %v1479, %v1773
    %v1775 = vand.u32 %v1774, 4294901760
    %1776 = vmatmul.mubr.f32.gmra.mxu0 %v1775
    %v1777 = vpop.f32.mrf.mxu0
    %v1778 = vadd.f32 %v1704, %v1777
    %v1779 = vpop.f32.mrf.mxu0
    %1780 = vdwg.mxu0
    %1781 = vmatprep.subr.mxu0 0.0
    %1782 = vmatpush1.msra.mxu0 0.0
    %1783 = vmatprep.subr.mxu0 0.0
    %1784 = vmatpush1.msra.mxu0 0.0
    %1785 = vmatprep.subr.mxu0 0.0
    %1786 = vmatpush1.msra.mxu0 0.0
    %1787 = vmatprep.subr.mxu0 0.0
    %1788 = vmatpush1.msra.mxu0 0.0
    %1789 = vmatprep.subr.mxu0 0.0
    %1790 = vmatpush1.msra.mxu0 0.0
    %1791 = vmatprep.subr.mxu0 0.0
    %1792 = vmatpush1.msra.mxu0 0.0
    %1793 = vmatprep.subr.mxu0 0.0
    %1794 = vmatpush1.msra.mxu0 0.0
    %1795 = vmatprep.subr.mxu0 0.0
    %1796 = vmatpush1.msra.mxu0 0.0
    %1797 = vmatprep.subr.mxu0 0.0
    %1798 = vmatpush1.msra.mxu0 0.0
    %1799 = vmatprep.subr.mxu0 0.0
    %1800 = vmatpush1.msra.mxu0 0.0
    %1801 = vmatprep.subr.mxu0 0.0
    %1802 = vmatpush1.msra.mxu0 0.0
    %1803 = vmatprep.subr.mxu0 0.0
    %1804 = vmatpush1.msra.mxu0 0.0
    %1805 = vmatprep.subr.mxu0 0.0
    %1806 = vmatpush1.msra.mxu0 0.0
    %1807 = vmatprep.subr.mxu0 0.0
    %1808 = vmatpush1.msra.mxu0 0.0
    %1809 = vmatprep.subr.mxu0 0.0
    %1810 = vmatpush1.msra.mxu0 0.0
    %1811 = vmatprep.subr.mxu0 0.0
    %v1812 = vand.u32 %v75, 4294901760
    %v1813 = vsub.f32 %v75, %v1812
    %v1814 = vand.u32 %v1813, 4294901760
    %1815 = vmatpush1.msra.mxu0 %v1814
    %1816 = vmatprep.subr.mxu0 0.0
    %1817 = vmatpush2.msra.mxu0 0.0
    %1818 = vmatprep.subr.mxu0 0.0
    %1819 = vmatpush2.msra.mxu0 0.0
    %1820 = vmatprep.subr.mxu0 0.0
    %1821 = vmatpush2.msra.mxu0 0.0
    %1822 = vmatprep.subr.mxu0 0.0
    %1823 = vmatpush2.msra.mxu0 0.0
    %1824 = vmatprep.subr.mxu0 0.0
    %1825 = vmatpush2.msra.mxu0 0.0
    %1826 = vmatprep.subr.mxu0 0.0
    %1827 = vmatpush2.msra.mxu0 0.0
    %1828 = vmatprep.subr.mxu0 0.0
    %1829 = vmatpush2.msra.mxu0 0.0
    %1830 = vmatprep.subr.mxu0 0.0
    %1831 = vmatpush2.msra.mxu0 0.0
    %1832 = vmatprep.subr.mxu0 0.0
    %1833 = vmatpush2.msra.mxu0 0.0
    %1834 = vmatprep.subr.mxu0 0.0
    %1835 = vmatpush2.msra.mxu0 0.0
    %1836 = vmatprep.subr.mxu0 0.0
    %1837 = vmatpush2.msra.mxu0 0.0
    %1838 = vmatprep.subr.mxu0 0.0
    %1839 = vmatpush2.msra.mxu0 0.0
    %1840 = vmatprep.subr.mxu0 0.0
    %1841 = vmatpush2.msra.mxu0 0.0
    %1842 = vmatprep.subr.mxu0 0.0
    %1843 = vmatpush2.msra.mxu0 0.0
    %1844 = vmatprep.subr.mxu0 0.0
    %1845 = vmatpush2.msra.mxu0 0.0
    %1846 = vmatprep.subr.mxu0 0.0
    %1847 = vmatpush2.msra.mxu0 0.0
    %1848 = vmatprep.mubr.f32.mxu0 0.0
    %v1849 = vand.u32 %v1479, 4294901760
    %1850 = vmatmul.mubr.f32.gmra.mxu0 %v1849
    %v1851 = vpop.f32.mrf.mxu0
    %v1852 = vadd.f32 %v1778, %v1851
    %v1853 = vpop.f32.mrf.mxu0
    %1854 = vdwg.mxu0
    %1855 = vmatprep.subr.mxu0 0.0
    %1856 = vmatpush1.msra.mxu0 0.0
    %1857 = vmatprep.subr.mxu0 0.0
    %1858 = vmatpush1.msra.mxu0 0.0
    %1859 = vmatprep.subr.mxu0 0.0
    %1860 = vmatpush1.msra.mxu0 0.0
    %1861 = vmatprep.subr.mxu0 0.0
    %1862 = vmatpush1.msra.mxu0 0.0
    %1863 = vmatprep.subr.mxu0 0.0
    %1864 = vmatpush1.msra.mxu0 0.0
    %1865 = vmatprep.subr.mxu0 0.0
    %1866 = vmatpush1.msra.mxu0 0.0
    %1867 = vmatprep.subr.mxu0 0.0
    %1868 = vmatpush1.msra.mxu0 0.0
    %1869 = vmatprep.subr.mxu0 0.0
    %1870 = vmatpush1.msra.mxu0 0.0
    %1871 = vmatprep.subr.mxu0 0.0
    %1872 = vmatpush1.msra.mxu0 0.0
    %1873 = vmatprep.subr.mxu0 0.0
    %1874 = vmatpush1.msra.mxu0 0.0
    %1875 = vmatprep.subr.mxu0 0.0
    %1876 = vmatpush1.msra.mxu0 0.0
    %1877 = vmatprep.subr.mxu0 0.0
    %1878 = vmatpush1.msra.mxu0 0.0
    %1879 = vmatprep.subr.mxu0 0.0
    %1880 = vmatpush1.msra.mxu0 0.0
    %1881 = vmatprep.subr.mxu0 0.0
    %1882 = vmatpush1.msra.mxu0 0.0
    %1883 = vmatprep.subr.mxu0 0.0
    %1884 = vmatpush1.msra.mxu0 0.0
    %1885 = vmatprep.subr.mxu0 0.0
    %v1886 = vand.u32 %v75, 4294901760
    %1887 = vmatpush1.msra.mxu0 %v1886
    %1888 = vmatprep.subr.mxu0 0.0
    %1889 = vmatpush2.msra.mxu0 0.0
    %1890 = vmatprep.subr.mxu0 0.0
    %1891 = vmatpush2.msra.mxu0 0.0
    %1892 = vmatprep.subr.mxu0 0.0
    %1893 = vmatpush2.msra.mxu0 0.0
    %1894 = vmatprep.subr.mxu0 0.0
    %1895 = vmatpush2.msra.mxu0 0.0
    %1896 = vmatprep.subr.mxu0 0.0
    %1897 = vmatpush2.msra.mxu0 0.0
    %1898 = vmatprep.subr.mxu0 0.0
    %1899 = vmatpush2.msra.mxu0 0.0
    %1900 = vmatprep.subr.mxu0 0.0
    %1901 = vmatpush2.msra.mxu0 0.0
    %1902 = vmatprep.subr.mxu0 0.0
    %1903 = vmatpush2.msra.mxu0 0.0
    %1904 = vmatprep.subr.mxu0 0.0
    %1905 = vmatpush2.msra.mxu0 0.0
    %1906 = vmatprep.subr.mxu0 0.0
    %1907 = vmatpush2.msra.mxu0 0.0
    %1908 = vmatprep.subr.mxu0 0.0
    %1909 = vmatpush2.msra.mxu0 0.0
    %1910 = vmatprep.subr.mxu0 0.0
    %1911 = vmatpush2.msra.mxu0 0.0
    %1912 = vmatprep.subr.mxu0 0.0
    %1913 = vmatpush2.msra.mxu0 0.0
    %1914 = vmatprep.subr.mxu0 0.0
    %1915 = vmatpush2.msra.mxu0 0.0
    %1916 = vmatprep.subr.mxu0 0.0
    %1917 = vmatpush2.msra.mxu0 0.0
    %1918 = vmatprep.subr.mxu0 0.0
    %1919 = vmatpush2.msra.mxu0 0.0
    %1920 = vmatprep.mubr.f32.mxu0 0.0
    %v1921 = vand.u32 %v1479, 4294901760
    %1922 = vmatmul.mubr.f32.gmra.mxu0 %v1921
    %v1923 = vpop.f32.mrf.mxu0
    %v1924 = vadd.f32 %v1852, %v1923
    %v1925 = vpop.f32.mrf.mxu0
    %1926 = vdwg.mxu0
    %v1927 = vld [vmem:[#allocation4] sm:$0xff]
    %v1928 = vld [vmem:[#allocation4 + $0x8] sm:$0xff]
    %1930 = vset.pattern.permute.xlu0 0
    %1931 = vperm.xlu0 %1930, %v995
    %v1932 = vpop.permute.xlu0 %1931
    %1935 = vset.pattern.permute.xlu0 0
    %1936 = vperm.xlu0 %1935, %v997
    %v1937 = vpop.permute.xlu0 %1936
    %v1939 = vmul.f32 %v1932, %v1927
    %v1940 = vmul.f32 %v1937, %v1928
    %v1941 = vadd.f32 %v1939, %v1475
    %v1942 = vadd.f32 %v1940, %v1924
    %1943 = vst.msk [vmem:[#allocation4] sm:$0xff] %vm76, %v1941
    %1944 = vst.msk [vmem:[#allocation4 + $0x8] sm:$0xff] %vm76, %v1942
    %1945 = vst.msk [vmem:[#allocation2] sm:$0xff] %vm1026, %v990
    %1946 = vst.msk [vmem:[#allocation2 + $0x8] sm:$0xff] %vm1026, %v991
    // Predicated region
    $region30: #{tpu_custom_call.1} parent=1 // pred_check
      %p1947 = pneg %p56
    $region31: #{tpu_custom_call.1} parent=1 // pred_check_branch
      %1949 = sbr.rel (%p1947) target = $region33
    $region32: #{tpu_custom_call.1} parent=1 // pred_region
      %v1950 = vld [vmem:[#allocation4] sm:$0xff]
      %v1951 = vld [vmem:[#allocation4 + $0x8] sm:$0xff]
      %v1952 = vld [vmem:[#allocation3] sm:$0xff]
      %v1953 = vld [vmem:[#allocation3 + $0x8] sm:$0xff]
      %1955 = vset.pattern.permute.xlu0 0
      %1956 = vperm.xlu0 %1955, %v1952
      %v1957 = vpop.permute.xlu0 %1956
      %1960 = vset.pattern.permute.xlu0 0
      %1961 = vperm.xlu0 %1960, %v1953
      %v1962 = vpop.permute.xlu0 %1961
      %v1964 = vrcp.pop %v1957
      %v1965 = vmul.f32 %v1950, %v1964
      %v1966 = vrcp.pop %v1962
      %v1967 = vmul.f32 %v1951, %v1966
      %1968 = vst.msk [vmem:[#allocation11] sm:$0xff] %vm76, %v1965
      %1969 = vst.msk [vmem:[#allocation11 + $0x8] sm:$0xff] %vm76, %v1967
    $region33: #{tpu_custom_call.1} parent=1 // pred_fallthru
      _
    // Predicated region
    $region34: #{tpu_custom_call.1} parent=1 // pred_check
      _
    $region35: #{tpu_custom_call.1} parent=1 // pred_check_branch
      %1971 = sbr.rel (0) target = $region37
    $region36: #{tpu_custom_call.1} parent=1 // pred_region
      %s1973 = ssub.s32 256, 256
      %1974 = vsyncadd [#allocation7], %s1973
      %s1975 = sshll.u32 [#allocation11], 4
      %s1976 = int_to_ptr.vmem [resolvable:$true] %s1975
      %1981 = dma.vmem_to_hbm [thread:$0]  %s1976, 256, %s3, [#allocation7], 128, 128, 8
    $region37: #{tpu_custom_call.1} parent=1 // pred_fallthru
      _
    // Predicated region
    $region38: #{tpu_custom_call.1} parent=1 // pred_check
      _
    $region39: #{tpu_custom_call.1} parent=1 // pred_check_branch
      %1983 = sbr.rel (0) target = $region41
    $region40: #{tpu_custom_call.1} parent=1 // pred_region
      %1984 = dma.done [#allocation7], 256
    $region41: #{tpu_custom_call.1} parent=1 // pred_fallthru
      _
    %1985 = vsyncpa [#allocation6], 1
    %1986 = vsyncpa [#allocation9], 1
    %1987 = vsyncpa [#allocation7], 1

</llo_original>
